<compile_context>
chip_gen: v5e
topology: v5e:2x2
jax: 0.10.0
libtpu: 0.0.40
codegen_flags: <defaults>
</compile_context>

<pallas_src>
import functools

import jax
import jax.numpy as jnp
from jax.experimental import pallas as pl
from jax.experimental.pallas import tpu as pltpu


# Concept configuration (range[0] >= 0 => relu + clamp branch of _apply_activation)
CONCEPT_CONFIG = {
    "name": "syntactic_complexity",
    "range": [0.0, 10.0],
    "model_type": "mlp",
}

TEXT_DIM = 768
BN_EPS = 1e-5
MAX_BATCH_TILE = 1024   # rows per grid step


def _syntax_kernel(
    x_ref,                     # [TB, 768] caller dtype (f32 or bf16)
    w1_ref, b1_ref,            # Linear(768,512)                 (w bf16, b f32)
    w2_ref, b2_ref,            # Linear(512,256) with BN1 folded (w bf16, b f32)
    w3_ref, b3_ref,            # Linear(256,128) with BN2 folded (w bf16, b f32)
    w4_ref, b4_ref,            # Linear(128,64)                  (w bf16, b f32)
    w5_ref, b5_ref,            # Linear(64,1) as a row [1,64] f32 + [1,1] f32
    o_ref,                     # [TB, 1] f32
    *, range_lo, range_hi,
):
    x = x_ref[...].astype(jnp.bfloat16)   # no-op when x is already streamed as bf16

    # layer 1: Linear -> ReLU                       (BN1 folded into layer 2)
    h = jnp.dot(x, w1_ref[...], preferred_element_type=jnp.float32) + b1_ref[...]
    h = jnp.maximum(h, 0.0)

    # layer 2: Linear(+BN1 affine) -> ReLU          (BN2 folded into layer 3)
    h = jnp.dot(h.astype(jnp.bfloat16), w2_ref[...],
                preferred_element_type=jnp.float32) + b2_ref[...]
    h = jnp.maximum(h, 0.0)

    # layer 3: Linear(+BN2 affine) -> ReLU
    h = jnp.dot(h.astype(jnp.bfloat16), w3_ref[...],
                preferred_element_type=jnp.float32) + b3_ref[...]
    h = jnp.maximum(h, 0.0)

    # layer 4: Linear -> ReLU
    h = jnp.dot(h.astype(jnp.bfloat16), w4_ref[...],
                preferred_element_type=jnp.float32) + b4_ref[...]
    h = jnp.maximum(h, 0.0)

    # layer 5: Linear(64,1) as VPU multiply + lane reduction (avoid N=1 MXU matmul)
    y = jnp.sum(h * w5_ref[...], axis=-1, keepdims=True) + b5_ref[...]

    # _apply_activation (branch chosen statically from the concept range)
    if range_lo >= 0:
        y = jnp.clip(jnp.maximum(y, 0.0), range_lo, range_hi)
    else:
        center = (range_lo + range_hi) / 2.0
        scale = (range_hi - range_lo) / 2.0
        y = jnp.tanh(y) * scale + center

    o_ref[...] = y.astype(o_ref.dtype)


def init_params(key):
    """Deterministic synthetic parameters (shapes match the PyTorch module)."""
    dims = [(TEXT_DIM, 512), (512, 256), (256, 128), (128, 64), (64, 1)]
    n_keys = 2 * len(dims) + 4 * 2          # 10 linear keys + 8 batchnorm keys
    keys = jax.random.split(key, n_keys)
    ki = iter(range(n_keys))
    params = {}
    for idx, (din, dout) in enumerate(dims, start=1):
        scale = 1.0 / jnp.sqrt(jnp.float32(din))
        params[f"w{idx}"] = jax.random.normal(keys[next(ki)], (din, dout), jnp.float32) * scale
        params[f"b{idx}"] = jax.random.normal(keys[next(ki)], (1, dout), jnp.float32) * 0.01
    # BatchNorm1d params (eval mode: running stats)
    for idx, feat in [(1, 512), (2, 256)]:
        params[f"bn{idx}_gamma"] = 1.0 + 0.1 * jax.random.normal(keys[next(ki)], (1, feat), jnp.float32)
        params[f"bn{idx}_beta"] = 0.1 * jax.random.normal(keys[next(ki)], (1, feat), jnp.float32)
        params[f"bn{idx}_mean"] = 0.05 * jax.random.normal(keys[next(ki)], (1, feat), jnp.float32)
        params[f"bn{idx}_var"] = jnp.abs(1.0 + 0.1 * jax.random.normal(keys[next(ki)], (1, feat), jnp.float32))
    return params


def _fold_bn(gamma, beta, mean, var):
    """Fold eval-mode BatchNorm1d into y = x * scale + shift."""
    inv_std = jax.lax.rsqrt(var + BN_EPS)
    scale = gamma * inv_std
    shift = beta - mean * scale
    return scale, shift


def prepare_operands(params):
    """One-time (outside hot path) BN folding + bf16 weight quantization."""
    s1, t1 = _fold_bn(params["bn1_gamma"], params["bn1_beta"],
                      params["bn1_mean"], params["bn1_var"])
    s2, t2 = _fold_bn(params["bn2_gamma"], params["bn2_beta"],
                      params["bn2_mean"], params["bn2_var"])

    # Fold BN1 affine into Linear2, BN2 affine into Linear3 (f32 math).
    w2f = s1.reshape(-1, 1) * params["w2"]
    b2f = t1 @ params["w2"] + params["b2"]
    w3f = s2.reshape(-1, 1) * params["w3"]
    b3f = t2 @ params["w3"] + params["b3"]

    bf16 = jnp.bfloat16
    w5_row = params["w5"].reshape(1, -1).astype(jnp.float32)   # [1, 64], VPU path

    return (
        params["w1"].astype(bf16), params["b1"].astype(jnp.float32),
        w2f.astype(bf16),          b2f.astype(jnp.float32),
        w3f.astype(bf16),          b3f.astype(jnp.float32),
        params["w4"].astype(bf16), params["b4"].astype(jnp.float32),
        w5_row,                    params["b5"].astype(jnp.float32),
    )


def _round_up(a, m):
    return ((a + m - 1) // m) * m


@jax.jit
def syntactic_complexity_forward(speech_features, text_features, ops):
    """Matches SyntacticComplexityPredictor.forward (speech_features unused)."""
    del speech_features  # unused, exactly as in the PyTorch module

    # Stream x in the producer's dtype (no extra HBM cast pass here).  If the
    # producer emits bf16, the dominant HBM read halves; f32 stays correct.
    x = text_features
    B = x.shape[0]

    # Batch tiling: sublane-aligned rows (16 for bf16 packing, 8 for f32),
    # <= MAX_BATCH_TILE per step, and >= 2 grid steps for large B so the
    # "parallel" axis shards across v7x's two TensorCores and pipelines DMA.
    row_align = 16 if x.dtype == jnp.bfloat16 else 8
    tb = min(MAX_BATCH_TILE, _round_up(max(pl.cdiv(B, 2), 1), row_align))
    grid = (pl.cdiv(B, tb),)

    # Scoped-VMEM budget: >= 32 MiB (covers v5e's 16 MiB default at tb=1024),
    # <= 56 MiB (headroom under v7x's 64 MiB physical VMEM).
    itemsize = jnp.dtype(x.dtype).itemsize
    est_vmem = (2 * tb * TEXT_DIM * itemsize     # double-buffered x tiles
                + 2 * tb * 4                     # double-buffered out tiles
                + (4 << 20)                      # weights/biases (<= 2 buffers)
                + 10 * tb * 512 * 4)             # intermediates + headroom
    vmem_limit = int(min(56 << 20, max(32 << 20, est_vmem)))

    kernel = functools.partial(
        _syntax_kernel,
        range_lo=float(CONCEPT_CONFIG["range"][0]),
        range_hi=float(CONCEPT_CONFIG["range"][1]),
    )

    # Weights/biases: full-array block with constant index_map -> VMEM-resident
    # across grid steps.  x / out tiles are pipelined over the batch axis; the
    # last block may be partial (reads clipped, stores masked), which is safe
    # because each output row depends only on its own input row.
    in_specs = [pl.BlockSpec((tb, TEXT_DIM), lambda i: (i, 0))]
    in_specs += [pl.BlockSpec(op.shape, lambda i: (0, 0)) for op in ops]

    out = pl.pallas_call(
        kernel,
        out_shape=jax.ShapeDtypeStruct((B, 1), jnp.float32),
        grid=grid,
        in_specs=in_specs,
        out_specs=pl.BlockSpec((tb, 1), lambda i: (i, 0)),
        compiler_params=pltpu.CompilerParams(
            dimension_semantics=("parallel",),
            vmem_limit_bytes=vmem_limit,
        ),
    )(x, *ops)
    return out


def _reference_forward(speech_features, text_features, ops):
    """Pure-JAX reference using the same folded / bf16-quantized operands."""
    del speech_features
    w1, b1, w2, b2, w3, b3, w4, b4, w5r, b5 = ops
    x = text_features.astype(jnp.float32)

    def lin(h, w, b):
        return jnp.dot(h.astype(jnp.bfloat16), w,
                       preferred_element_type=jnp.float32) + b

    h = jnp.maximum(lin(x, w1, b1), 0.0)
    h = jnp.maximum(lin(h, w2, b2), 0.0)
    h = jnp.maximum(lin(h, w3, b3), 0.0)
    h = jnp.maximum(lin(h, w4, b4), 0.0)
    y = jnp.sum(h * w5r, axis=-1, keepdims=True) + b5
    lo, hi = CONCEPT_CONFIG["range"]
    return jnp.clip(jnp.maximum(y, 0.0), lo, hi)


if __name__ == "__main__":
    key = jax.random.PRNGKey(0)
    k_param, k_speech, k_text, k_text2 = jax.random.split(key, 4)

    B, T = 2, 8
    params = init_params(k_param)
    ops = prepare_operands(params)

    # --- main check: f32 input, single (partial) block, B=2 ---
    speech_features = jax.random.normal(k_speech, (B, T, TEXT_DIM), jnp.float32)
    text_features = jax.random.normal(k_text, (B, TEXT_DIM), jnp.float32)

    out = jax.block_until_ready(
        syntactic_complexity_forward(speech_features, text_features, ops))
    ref = _reference_forward(speech_features, text_features, ops)
    assert out.shape == (B, 1), out.shape
    assert jnp.allclose(out, ref, atol=1e-3, rtol=1e-3), (out, ref)

    # --- secondary check: bf16 streaming path + multi-step grid with a
    #     partial last block (B=40 -> tb=32, grid=(2,), last block 8/32 valid) ---
    B2 = 40
    text_bf16 = jax.random.normal(k_text2, (B2, TEXT_DIM), jnp.float32).astype(jnp.bfloat16)
    speech2 = jnp.zeros((B2, T, TEXT_DIM), jnp.float32)
    out2 = jax.block_until_ready(
        syntactic_complexity_forward(speech2, text_bf16, ops))
    ref2 = _reference_forward(speech2, text_bf16, ops)
    assert out2.shape == (B2, 1), out2.shape
    assert jnp.allclose(out2, ref2, atol=1e-3, rtol=1e-3), (out2, ref2)

    print("KERNEL_OK")
</pallas_src>

<mosaic_0001>
module attributes {stable_mosaic.version = 11 : i64} {
  func.func @_syntax_kernel(%arg0: i32, %arg1: memref<8x768xf32, #tpu.memory_space<vmem>>, %arg2: memref<768x512xbf16, #tpu.memory_space<vmem>>, %arg3: memref<1x512xf32, #tpu.memory_space<vmem>>, %arg4: memref<512x256xbf16, #tpu.memory_space<vmem>>, %arg5: memref<1x256xf32, #tpu.memory_space<vmem>>, %arg6: memref<256x128xbf16, #tpu.memory_space<vmem>>, %arg7: memref<1x128xf32, #tpu.memory_space<vmem>>, %arg8: memref<128x64xbf16, #tpu.memory_space<vmem>>, %arg9: memref<1x64xf32, #tpu.memory_space<vmem>>, %arg10: memref<1x64xf32, #tpu.memory_space<vmem>>, %arg11: memref<1x1xf32, #tpu.memory_space<vmem>>, %arg12: memref<8x1xf32, #tpu.memory_space<vmem>>) attributes {dimension_semantics = [#tpu.dimension_semantics<parallel>], iteration_bounds = array<i64: 1>, scalar_prefetch = 0 : i64, scratch_operands = 0 : i64, tpu.core_type = #tpu.core_type<tc>, window_params = [{transform_indices = @transform_0, window_bounds = array<i64: 8, 768>}, {pipeline_mode = #tpu.pipeline_mode<synchronous>, transform_indices = @transform_1, window_bounds = array<i64: 768, 512>}, {pipeline_mode = #tpu.pipeline_mode<synchronous>, transform_indices = @transform_2, window_bounds = array<i64: 1, 512>}, {pipeline_mode = #tpu.pipeline_mode<synchronous>, transform_indices = @transform_3, window_bounds = array<i64: 512, 256>}, {pipeline_mode = #tpu.pipeline_mode<synchronous>, transform_indices = @transform_4, window_bounds = array<i64: 1, 256>}, {pipeline_mode = #tpu.pipeline_mode<synchronous>, transform_indices = @transform_5, window_bounds = array<i64: 256, 128>}, {pipeline_mode = #tpu.pipeline_mode<synchronous>, transform_indices = @transform_6, window_bounds = array<i64: 1, 128>}, {pipeline_mode = #tpu.pipeline_mode<synchronous>, transform_indices = @transform_7, window_bounds = array<i64: 128, 64>}, {pipeline_mode = #tpu.pipeline_mode<synchronous>, transform_indices = @transform_8, window_bounds = array<i64: 1, 64>}, {pipeline_mode = #tpu.pipeline_mode<synchronous>, transform_indices = @transform_9, window_bounds = array<i64: 1, 64>}, {pipeline_mode = #tpu.pipeline_mode<synchronous>, transform_indices = @transform_10, window_bounds = array<i64: 1, 1>}, {transform_indices = @transform_11, window_bounds = array<i64: 8, 1>}]} {
    %c0 = arith.constant 0 : index
    %c0_0 = arith.constant 0 : index
    %0 = vector.load %arg1[%c0, %c0_0] : memref<8x768xf32, #tpu.memory_space<vmem>>, vector<8x768xf32>
    %1 = arith.truncf %0 : vector<8x768xf32> to vector<8x768xbf16>
    %c0_1 = arith.constant 0 : index
    %c0_2 = arith.constant 0 : index
    %2 = vector.load %arg2[%c0_1, %c0_2] : memref<768x512xbf16, #tpu.memory_space<vmem>>, vector<768x512xbf16>
    %cst = arith.constant dense<0.000000e+00> : vector<8x512xf32>
    %3 = tpu.matmul %1, %2, %cst {dimension_numbers = #tpu.dot_dimension_numbers<[1], [0], [0], [1], [0, 0, 1, 1], [], []>} : vector<8x768xbf16>, vector<768x512xbf16>, vector<8x512xf32> -> vector<8x512xf32>
    %c0_3 = arith.constant 0 : index
    %c0_4 = arith.constant 0 : index
    %4 = vector.load %arg3[%c0_3, %c0_4] : memref<1x512xf32, #tpu.memory_space<vmem>>, vector<1x512xf32>
    %5 = vector.broadcast %4 : vector<1x512xf32> to vector<8x512xf32>
    %6 = arith.addf %3, %5 : vector<8x512xf32>
    %cst_5 = arith.constant 0.000000e+00 : f32
    %7 = vector.broadcast %cst_5 : f32 to vector<8x512xf32>
    %8 = arith.maximumf %6, %7 : vector<8x512xf32>
    %9 = arith.truncf %8 : vector<8x512xf32> to vector<8x512xbf16>
    %c0_6 = arith.constant 0 : index
    %c0_7 = arith.constant 0 : index
    %10 = vector.load %arg4[%c0_6, %c0_7] : memref<512x256xbf16, #tpu.memory_space<vmem>>, vector<512x256xbf16>
    %cst_8 = arith.constant dense<0.000000e+00> : vector<8x256xf32>
    %11 = tpu.matmul %9, %10, %cst_8 {dimension_numbers = #tpu.dot_dimension_numbers<[1], [0], [0], [1], [0, 0, 1, 1], [], []>} : vector<8x512xbf16>, vector<512x256xbf16>, vector<8x256xf32> -> vector<8x256xf32>
    %c0_9 = arith.constant 0 : index
    %c0_10 = arith.constant 0 : index
    %12 = vector.load %arg5[%c0_9, %c0_10] : memref<1x256xf32, #tpu.memory_space<vmem>>, vector<1x256xf32>
    %13 = vector.broadcast %12 : vector<1x256xf32> to vector<8x256xf32>
    %14 = arith.addf %11, %13 : vector<8x256xf32>
    %cst_11 = arith.constant 0.000000e+00 : f32
    %15 = vector.broadcast %cst_11 : f32 to vector<8x256xf32>
    %16 = arith.maximumf %14, %15 : vector<8x256xf32>
    %17 = arith.truncf %16 : vector<8x256xf32> to vector<8x256xbf16>
    %c0_12 = arith.constant 0 : index
    %c0_13 = arith.constant 0 : index
    %18 = vector.load %arg6[%c0_12, %c0_13] : memref<256x128xbf16, #tpu.memory_space<vmem>>, vector<256x128xbf16>
    %cst_14 = arith.constant dense<0.000000e+00> : vector<8x128xf32>
    %19 = tpu.matmul %17, %18, %cst_14 {dimension_numbers = #tpu.dot_dimension_numbers<[1], [0], [0], [1], [0, 0, 1, 1], [], []>} : vector<8x256xbf16>, vector<256x128xbf16>, vector<8x128xf32> -> vector<8x128xf32>
    %c0_15 = arith.constant 0 : index
    %c0_16 = arith.constant 0 : index
    %20 = vector.load %arg7[%c0_15, %c0_16] : memref<1x128xf32, #tpu.memory_space<vmem>>, vector<1x128xf32>
    %21 = vector.broadcast %20 : vector<1x128xf32> to vector<8x128xf32>
    %22 = arith.addf %19, %21 : vector<8x128xf32>
    %cst_17 = arith.constant 0.000000e+00 : f32
    %23 = vector.broadcast %cst_17 : f32 to vector<8x128xf32>
    %24 = arith.maximumf %22, %23 : vector<8x128xf32>
    %25 = arith.truncf %24 : vector<8x128xf32> to vector<8x128xbf16>
    %c0_18 = arith.constant 0 : index
    %c0_19 = arith.constant 0 : index
    %26 = vector.load %arg8[%c0_18, %c0_19] : memref<128x64xbf16, #tpu.memory_space<vmem>>, vector<128x64xbf16>
    %cst_20 = arith.constant dense<0.000000e+00> : vector<8x64xf32>
    %27 = tpu.matmul %25, %26, %cst_20 {dimension_numbers = #tpu.dot_dimension_numbers<[1], [0], [0], [1], [0, 0, 1, 1], [], []>} : vector<8x128xbf16>, vector<128x64xbf16>, vector<8x64xf32> -> vector<8x64xf32>
    %c0_21 = arith.constant 0 : index
    %c0_22 = arith.constant 0 : index
    %28 = vector.load %arg9[%c0_21, %c0_22] : memref<1x64xf32, #tpu.memory_space<vmem>>, vector<1x64xf32>
    %29 = vector.broadcast %28 : vector<1x64xf32> to vector<8x64xf32>
    %30 = arith.addf %27, %29 : vector<8x64xf32>
    %cst_23 = arith.constant 0.000000e+00 : f32
    %31 = vector.broadcast %cst_23 : f32 to vector<8x64xf32>
    %32 = arith.maximumf %30, %31 : vector<8x64xf32>
    %c0_24 = arith.constant 0 : index
    %c0_25 = arith.constant 0 : index
    %33 = vector.load %arg10[%c0_24, %c0_25] : memref<1x64xf32, #tpu.memory_space<vmem>>, vector<1x64xf32>
    %34 = vector.broadcast %33 : vector<1x64xf32> to vector<8x64xf32>
    %35 = arith.mulf %32, %34 : vector<8x64xf32>
    %cst_26 = arith.constant dense<0.000000e+00> : vector<8xf32>
    %36 = vector.multi_reduction <add>, %35, %cst_26 [1] : vector<8x64xf32> to vector<8xf32>
    %37 = vector.shape_cast %36 : vector<8xf32> to vector<8x1xf32>
    %c0_27 = arith.constant 0 : index
    %c0_28 = arith.constant 0 : index
    %38 = vector.load %arg11[%c0_27, %c0_28] : memref<1x1xf32, #tpu.memory_space<vmem>>, vector<1x1xf32>
    %39 = vector.broadcast %38 : vector<1x1xf32> to vector<8x1xf32>
    %40 = arith.addf %37, %39 : vector<8x1xf32>
    %cst_29 = arith.constant 0.000000e+00 : f32
    %41 = vector.broadcast %cst_29 : f32 to vector<8x1xf32>
    %42 = arith.maximumf %40, %41 : vector<8x1xf32>
    %cst_30 = arith.constant 0.000000e+00 : f32
    %cst_31 = arith.constant 1.000000e+01 : f32
    %43 = vector.broadcast %cst_30 : f32 to vector<8x1xf32>
    %44 = arith.maximumf %43, %42 : vector<8x1xf32>
    %45 = vector.broadcast %cst_31 : f32 to vector<8x1xf32>
    %46 = arith.minimumf %45, %44 : vector<8x1xf32>
    %c0_32 = arith.constant 0 : index
    %c0_33 = arith.constant 0 : index
    %47 = vector.load %arg12[%c0_32, %c0_33] : memref<8x1xf32, #tpu.memory_space<vmem>>, vector<8x1xf32>
    tpu.vector_store %arg12[%c0_32, %c0_33], %46 {strides = array<i32>} : memref<8x1xf32, #tpu.memory_space<vmem>>, vector<8x1xf32>,
    return
  }
  func.func @transform_0(%arg0: i32) -> (i32, i32) {
    %c0_i32 = arith.constant 0 : i32
    %c0_i32_0 = arith.constant 0 : i32
    return %arg0, %c0_i32 : i32, i32
  }
  func.func @transform_1(%arg0: i32) -> (i32, i32) {
    %c0_i32 = arith.constant 0 : i32
    %c0_i32_0 = arith.constant 0 : i32
    %c0_i32_1 = arith.constant 0 : i32
    return %c0_i32, %c0_i32_0 : i32, i32
  }
  func.func @transform_2(%arg0: i32) -> (i32, i32) {
    %c0_i32 = arith.constant 0 : i32
    %c0_i32_0 = arith.constant 0 : i32
    %c0_i32_1 = arith.constant 0 : i32
    return %c0_i32, %c0_i32_0 : i32, i32
  }
  func.func @transform_3(%arg0: i32) -> (i32, i32) {
    %c0_i32 = arith.constant 0 : i32
    %c0_i32_0 = arith.constant 0 : i32
    %c0_i32_1 = arith.constant 0 : i32
    return %c0_i32, %c0_i32_0 : i32, i32
  }
  func.func @transform_4(%arg0: i32) -> (i32, i32) {
    %c0_i32 = arith.constant 0 : i32
    %c0_i32_0 = arith.constant 0 : i32
    %c0_i32_1 = arith.constant 0 : i32
    return %c0_i32, %c0_i32_0 : i32, i32
  }
  func.func @transform_5(%arg0: i32) -> (i32, i32) {
    %c0_i32 = arith.constant 0 : i32
    %c0_i32_0 = arith.constant 0 : i32
    %c0_i32_1 = arith.constant 0 : i32
    return %c0_i32, %c0_i32_0 : i32, i32
  }
  func.func @transform_6(%arg0: i32) -> (i32, i32) {
    %c0_i32 = arith.constant 0 : i32
    %c0_i32_0 = arith.constant 0 : i32
    %c0_i32_1 = arith.constant 0 : i32
    return %c0_i32, %c0_i32_0 : i32, i32
  }
  func.func @transform_7(%arg0: i32) -> (i32, i32) {
    %c0_i32 = arith.constant 0 : i32
    %c0_i32_0 = arith.constant 0 : i32
    %c0_i32_1 = arith.constant 0 : i32
    return %c0_i32, %c0_i32_0 : i32, i32
  }
  func.func @transform_8(%arg0: i32) -> (i32, i32) {
    %c0_i32 = arith.constant 0 : i32
    %c0_i32_0 = arith.constant 0 : i32
    %c0_i32_1 = arith.constant 0 : i32
    return %c0_i32, %c0_i32_0 : i32, i32
  }
  func.func @transform_9(%arg0: i32) -> (i32, i32) {
    %c0_i32 = arith.constant 0 : i32
    %c0_i32_0 = arith.constant 0 : i32
    %c0_i32_1 = arith.constant 0 : i32
    return %c0_i32, %c0_i32_0 : i32, i32
  }
  func.func @transform_10(%arg0: i32) -> (i32, i32) {
    %c0_i32 = arith.constant 0 : i32
    %c0_i32_0 = arith.constant 0 : i32
    %c0_i32_1 = arith.constant 0 : i32
    return %c0_i32, %c0_i32_0 : i32, i32
  }
  func.func @transform_11(%arg0: i32) -> (i32, i32) {
    %c0_i32 = arith.constant 0 : i32
    %c0_i32_0 = arith.constant 0 : i32
    return %arg0, %c0_i32 : i32, i32
  }
}

</mosaic_0001>

<llo_original>
// kernel: syntactic_complexity_forward.1
$region0: #{syntactic_complexity_forward.1}
  #allocation0 [shape = 'u32[]', space=smem, size = 0x4, offset = 0x4, fixed_abs, tag = 'smem constant byte address 0x4 - core index']
  #allocation1 [shape = 'u32[72,128]{1,0:T(1,128)}', space=vmem, size = 0x9000, scoped, tag = 'internal scratch']
  #allocation2 [shape = 'f32[1,1]{1,0:T(1,128)S(1)}', space=vmem, size = 0x200, scoped, tag = 'scoped memory for syntactic_complexity_forward.1']
  %s0 = inlined_call_operand.vmem [shape: f32[2,768], index: 0, kind: input, shape index: {}]
  %s1 = inlined_call_operand.hbm [shape: bf16[768,512], index: 1, kind: input, shape index: {}]
  %s2 = inlined_call_operand.vmem [shape: f32[1,512], index: 2, kind: input, shape index: {}]
  %s3 = inlined_call_operand.hbm [shape: bf16[512,256], index: 3, kind: input, shape index: {}]
  %s4 = inlined_call_operand.vmem [shape: f32[1,256], index: 4, kind: input, shape index: {}]
  %s5 = inlined_call_operand.hbm [shape: bf16[256,128], index: 5, kind: input, shape index: {}]
  %s6 = inlined_call_operand.vmem [shape: f32[1,128], index: 6, kind: input, shape index: {}]
  %s7 = inlined_call_operand.vmem [shape: bf16[128,64], index: 7, kind: input, shape index: {}]
  %s8 = inlined_call_operand.vmem [shape: f32[1,64], index: 8, kind: input, shape index: {}]
  %s9 = inlined_call_operand.vmem [shape: f32[1,64], index: 9, kind: input, shape index: {}]
  %s10 = inlined_call_operand.<no memory space> [shape: f32[1,1], index: 10, kind: input, shape index: {}]
  %s11 = inlined_call_operand.vmem [shape: f32[2,1], index: 11, kind: output, shape index: {}]
  %s12 = sld [smem:[#allocation0]]
  $region96: #{syntactic_complexity_forward.1} parent=0
    _
  %s14 = ssub.s32 1, %s12
  %s15 = scalar_select 0, %s14, %s12
  %v16 = vstv %s10
  %17 = vst [vmem:[#allocation2] sm:$0x1] %v16
  $region1: #{syntactic_complexity_forward.1} parent=0
    #allocation3 [shape = 'u8[786432]{0}', space=vmem, size = 0xc0000, scoped, tag = 'input window, operand 1, single buffered']
    #allocation4 [shape = 's32[1]{0}', space=sflag, size = 0x4, scoped, tag = 'scoped memory for syntactic_complexity_forward.1']
    #allocation5 [shape = 'u8[262144]{0}', space=vmem, size = 0x40000, scoped, tag = 'input window, operand 3, single buffered']
    #allocation6 [shape = 's32[1]{0}', space=sflag, size = 0x4, scoped, tag = 'scoped memory for syntactic_complexity_forward.1']
    #allocation7 [shape = 'u8[65536]{0}', space=vmem, size = 0x10000, scoped, tag = 'input window, operand 5, single buffered']
    #allocation8 [shape = 'u8[4096]{0}', space=vmem, size = 0x1000, scoped, tag = 'output window, operand 0, single buffered']
    %18 = vsyncpa [#allocation4], 0
    %19 = vsyncpa [#allocation6], 0
    // Predicated region
    $region2: #{syntactic_complexity_forward.1} parent=1 // pred_check
      _
    $region3: #{syntactic_complexity_forward.1} parent=1 // pred_check_branch
      %21 = sbr.rel (0) target = $region5
    $region4: #{syntactic_complexity_forward.1} parent=1 // pred_region
      _
    $region5: #{syntactic_complexity_forward.1} parent=1 // pred_fallthru
      _
    // Predicated region
    $region6: #{syntactic_complexity_forward.1} parent=1 // pred_check
      _
    $region7: #{syntactic_complexity_forward.1} parent=1 // pred_check_branch
      %23 = sbr.rel (0) target = $region9
    $region8: #{syntactic_complexity_forward.1} parent=1 // pred_region
      %25 = vsyncadd [#allocation4], 0
      %s26 = sshll.u32 %s1, 4
      %s27 = int_to_ptr.hbm [resolvable:$true] %s26
      %s28 = sshll.u32 [#allocation3], 4
      %s29 = int_to_ptr.vmem [resolvable:$true] %s28
      %34 = dma.hbm_to_vmem [thread:$0]  %s27, 24576, %s29, [#allocation4], 256, 256, 16
    $region9: #{syntactic_complexity_forward.1} parent=1 // pred_fallthru
      _
    // Predicated region
    $region10: #{syntactic_complexity_forward.1} parent=1 // pred_check
      _
    $region11: #{syntactic_complexity_forward.1} parent=1 // pred_check_branch
      %36 = sbr.rel (0) target = $region13
    $region12: #{syntactic_complexity_forward.1} parent=1 // pred_region
      _
    $region13: #{syntactic_complexity_forward.1} parent=1 // pred_fallthru
      _
    // Predicated region
    $region14: #{syntactic_complexity_forward.1} parent=1 // pred_check
      _
    $region15: #{syntactic_complexity_forward.1} parent=1 // pred_check_branch
      %38 = sbr.rel (0) target = $region17
    $region16: #{syntactic_complexity_forward.1} parent=1 // pred_region
      %40 = vsyncadd [#allocation6], 0
      %s41 = sshll.u32 %s3, 4
      %s42 = int_to_ptr.hbm [resolvable:$true] %s41
      %s43 = sshll.u32 [#allocation5], 4
      %s44 = int_to_ptr.vmem [resolvable:$true] %s43
      %49 = dma.hbm_to_vmem [thread:$0]  %s42, 8192, %s44, [#allocation6], 128, 128, 8
    $region17: #{syntactic_complexity_forward.1} parent=1 // pred_fallthru
      _
    // Predicated region
    $region18: #{syntactic_complexity_forward.1} parent=1 // pred_check
      _
    $region19: #{syntactic_complexity_forward.1} parent=1 // pred_check_branch
      %51 = sbr.rel (0) target = $region21
    $region20: #{syntactic_complexity_forward.1} parent=1 // pred_region
      _
    $region21: #{syntactic_complexity_forward.1} parent=1 // pred_fallthru
      _
    // Predicated region
    $region22: #{syntactic_complexity_forward.1} parent=1 // pred_check
      _
    $region23: #{syntactic_complexity_forward.1} parent=1 // pred_check_branch
      %53 = sbr.rel (0) target = $region25
    $region24: #{syntactic_complexity_forward.1} parent=1 // pred_region
      %55 = vsyncadd [#allocation6], 0
      %s56 = sshll.u32 %s5, 4
      %s57 = int_to_ptr.hbm [resolvable:$true] %s56
      %s58 = sshll.u32 [#allocation7], 4
      %s59 = int_to_ptr.vmem [resolvable:$true] %s58
      %64 = dma.hbm_to_vmem [thread:$0]  %s57, 2048, %s59, [#allocation6], 64, 64, 4
    $region25: #{syntactic_complexity_forward.1} parent=1 // pred_fallthru
      _
    // Predicated region
    $region26: #{syntactic_complexity_forward.1} parent=1 // pred_check
      _
    $region27: #{syntactic_complexity_forward.1} parent=1 // pred_check_branch
      %66 = sbr.rel (0) target = $region29
    $region28: #{syntactic_complexity_forward.1} parent=1 // pred_region
      _
    $region29: #{syntactic_complexity_forward.1} parent=1 // pred_fallthru
      _
    // Predicated region
    $region30: #{syntactic_complexity_forward.1} parent=1 // pred_check
      _
    $region31: #{syntactic_complexity_forward.1} parent=1 // pred_check_branch
      %68 = sbr.rel (0) target = $region33
    $region32: #{syntactic_complexity_forward.1} parent=1 // pred_region
      _
    $region33: #{syntactic_complexity_forward.1} parent=1 // pred_fallthru
      _
    // Predicated region
    $region34: #{syntactic_complexity_forward.1} parent=1 // pred_check
      _
    $region35: #{syntactic_complexity_forward.1} parent=1 // pred_check_branch
      %70 = sbr.rel (0) target = $region37
    $region36: #{syntactic_complexity_forward.1} parent=1 // pred_region
      _
    $region37: #{syntactic_complexity_forward.1} parent=1 // pred_fallthru
      _
    // Predicated region
    $region38: #{syntactic_complexity_forward.1} parent=1 // pred_check
      _
    $region39: #{syntactic_complexity_forward.1} parent=1 // pred_check_branch
      %72 = sbr.rel (0) target = $region41
    $region40: #{syntactic_complexity_forward.1} parent=1 // pred_region
      _
    $region41: #{syntactic_complexity_forward.1} parent=1 // pred_fallthru
      _
    // Predicated region
    $region42: #{syntactic_complexity_forward.1} parent=1 // pred_check
      _
    $region43: #{syntactic_complexity_forward.1} parent=1 // pred_check_branch
      %74 = sbr.rel (0) target = $region45
    $region44: #{syntactic_complexity_forward.1} parent=1 // pred_region
      _
    $region45: #{syntactic_complexity_forward.1} parent=1 // pred_fallthru
      _
    // Predicated region
    $region46: #{syntactic_complexity_forward.1} parent=1 // pred_check
      _
    $region47: #{syntactic_complexity_forward.1} parent=1 // pred_check_branch
      %76 = sbr.rel (0) target = $region49
    $region48: #{syntactic_complexity_forward.1} parent=1 // pred_region
      %78 = dma.done [#allocation4], 24576
    $region49: #{syntactic_complexity_forward.1} parent=1 // pred_fallthru
      _
    // Predicated region
    $region50: #{syntactic_complexity_forward.1} parent=1 // pred_check
      _
    $region51: #{syntactic_complexity_forward.1} parent=1 // pred_check_branch
      %80 = sbr.rel (0) target = $region53
    $region52: #{syntactic_complexity_forward.1} parent=1 // pred_region
      %82 = dma.done [#allocation6], 8192
    $region53: #{syntactic_complexity_forward.1} parent=1 // pred_fallthru
      _
    // Predicated region
    $region54: #{syntactic_complexity_forward.1} parent=1 // pred_check
      _
    $region55: #{syntactic_complexity_forward.1} parent=1 // pred_check_branch
      %84 = sbr.rel (0) target = $region57
    $region56: #{syntactic_complexity_forward.1} parent=1 // pred_region
      %86 = dma.done [#allocation6], 2048
    $region57: #{syntactic_complexity_forward.1} parent=1 // pred_fallthru
      _
    %v87 = vld [vmem:[%s0] sm:$0xff]
    %v88 = vld [vmem:[%s0 + $0x8] sm:$0xf]
    %v89 = vld [vmem:[%s0 + $0xc] sm:$0xff]
    %v90 = vld [vmem:[%s0 + $0x14] sm:$0xf]
    %v91 = vld [vmem:[%s0 + $0x18] sm:$0xff]
    %v92 = vld [vmem:[%s0 + $0x20] sm:$0xf]
    %v93 = vld [vmem:[%s0 + $0x24] sm:$0xff]
    %v94 = vld [vmem:[%s0 + $0x2c] sm:$0xf]
    %103 = vst [vmem:[#allocation1] ss:$4 sm:$0xff] %v87
    %s104 = scalar_lea.vmem [#allocation1], 1
    %105 = vst [vmem:[%s104] ss:$4 sm:$0xff] %v89
    %s106 = scalar_lea.vmem [#allocation1], 2
    %107 = vst [vmem:[%s106] ss:$4 sm:$0xff] %v91
    %s108 = scalar_lea.vmem [#allocation1], 3
    %109 = vst [vmem:[%s108] ss:$4 sm:$0xff] %v93
    %s110 = scalar_lea.vmem [#allocation1], 32
    %111 = vst [vmem:[%s110] ss:$4 sm:$0xff] %v88
    %s112 = scalar_lea.vmem [#allocation1], 33
    %113 = vst [vmem:[%s112] ss:$4 sm:$0xff] %v90
    %s114 = scalar_lea.vmem [#allocation1], 34
    %115 = vst [vmem:[%s114] ss:$4 sm:$0xff] %v92
    %s116 = scalar_lea.vmem [#allocation1], 35
    %117 = vst [vmem:[%s116] ss:$4 sm:$0xff] %v94
    %v118 = vld.sshfl [vmem:[#allocation1] sm:$0xff pattern:$0x73625140]
    %v119 = vld.sshfl [vmem:[#allocation1 + $0x8] sm:$0xff pattern:$0x73625140]
    %v120 = vld.sshfl [vmem:[#allocation1 + $0x10] sm:$0xff pattern:$0x73625140]
    %v121 = vld.sshfl [vmem:[#allocation1 + $0x18] sm:$0xff pattern:$0x73625140]
    %v122 = vld.sshfl [vmem:[#allocation1 + $0x20] sm:$0xff pattern:$0x73625140]
    %v123 = vld.sshfl [vmem:[#allocation1 + $0x28] sm:$0xff pattern:$0x73625140]
    %v130 = vpack.c.bf16 %v118, %v118
    %v131 = vpack.c.bf16 %v119, %v119
    %v132 = vpack.c.bf16 %v120, %v120
    %v133 = vpack.c.bf16 %v121, %v121
    %v134 = vpack.c.bf16 %v122, %v122
    %v135 = vpack.c.bf16 %v123, %v123
    %v136 = vld [vmem:[#allocation3] sm:$0xff]
    %v137 = vld [vmem:[#allocation3 + $0x8] sm:$0xff]
    %v138 = vld [vmem:[#allocation3 + $0x10] sm:$0xff]
    %v139 = vld [vmem:[#allocation3 + $0x18] sm:$0xff]
    %v140 = vld [vmem:[#allocation3 + $0x20] sm:$0xff]
    %v141 = vld [vmem:[#allocation3 + $0x28] sm:$0xff]
    %v142 = vld [vmem:[#allocation3 + $0x30] sm:$0xff]
    %v143 = vld [vmem:[#allocation3 + $0x38] sm:$0xff]
    %v144 = vld [vmem:[#allocation3 + $0x40] sm:$0xff]
    %v145 = vld [vmem:[#allocation3 + $0x48] sm:$0xff]
    %v146 = vld [vmem:[#allocation3 + $0x50] sm:$0xff]
    %v147 = vld [vmem:[#allocation3 + $0x58] sm:$0xff]
    %v148 = vld [vmem:[#allocation3 + $0x60] sm:$0xff]
    %v149 = vld [vmem:[#allocation3 + $0x68] sm:$0xff]
    %v150 = vld [vmem:[#allocation3 + $0x70] sm:$0xff]
    %v151 = vld [vmem:[#allocation3 + $0x78] sm:$0xff]
    %v152 = vld [vmem:[#allocation3 + $0x80] sm:$0xff]
    %v153 = vld [vmem:[#allocation3 + $0x88] sm:$0xff]
    %v154 = vld [vmem:[#allocation3 + $0x90] sm:$0xff]
    %v155 = vld [vmem:[#allocation3 + $0x98] sm:$0xff]
    %v156 = vld [vmem:[#allocation3 + $0xa0] sm:$0xff]
    %v157 = vld [vmem:[#allocation3 + $0xa8] sm:$0xff]
    %v158 = vld [vmem:[#allocation3 + $0xb0] sm:$0xff]
    %v159 = vld [vmem:[#allocation3 + $0xb8] sm:$0xff]
    %v160 = vld [vmem:[#allocation3 + $0xc0] sm:$0xff]
    %v161 = vld [vmem:[#allocation3 + $0xc8] sm:$0xff]
    %v162 = vld [vmem:[#allocation3 + $0xd0] sm:$0xff]
    %v163 = vld [vmem:[#allocation3 + $0xd8] sm:$0xff]
    %v164 = vld [vmem:[#allocation3 + $0xe0] sm:$0xff]
    %v165 = vld [vmem:[#allocation3 + $0xe8] sm:$0xff]
    %v166 = vld [vmem:[#allocation3 + $0xf0] sm:$0xff]
    %v167 = vld [vmem:[#allocation3 + $0xf8] sm:$0xff]
    %v168 = vld [vmem:[#allocation3 + $0x100] sm:$0xff]
    %v169 = vld [vmem:[#allocation3 + $0x108] sm:$0xff]
    %v170 = vld [vmem:[#allocation3 + $0x110] sm:$0xff]
    %v171 = vld [vmem:[#allocation3 + $0x118] sm:$0xff]
    %v172 = vld [vmem:[#allocation3 + $0x120] sm:$0xff]
    %v173 = vld [vmem:[#allocation3 + $0x128] sm:$0xff]
    %v174 = vld [vmem:[#allocation3 + $0x130] sm:$0xff]
    %v175 = vld [vmem:[#allocation3 + $0x138] sm:$0xff]
    %v176 = vld [vmem:[#allocation3 + $0x140] sm:$0xff]
    %v177 = vld [vmem:[#allocation3 + $0x148] sm:$0xff]
    %v178 = vld [vmem:[#allocation3 + $0x150] sm:$0xff]
    %v179 = vld [vmem:[#allocation3 + $0x158] sm:$0xff]
    %v180 = vld [vmem:[#allocation3 + $0x160] sm:$0xff]
    %v181 = vld [vmem:[#allocation3 + $0x168] sm:$0xff]
    %v182 = vld [vmem:[#allocation3 + $0x170] sm:$0xff]
    %v183 = vld [vmem:[#allocation3 + $0x178] sm:$0xff]
    %v184 = vld [vmem:[#allocation3 + $0x180] sm:$0xff]
    %v185 = vld [vmem:[#allocation3 + $0x188] sm:$0xff]
    %v186 = vld [vmem:[#allocation3 + $0x190] sm:$0xff]
    %v187 = vld [vmem:[#allocation3 + $0x198] sm:$0xff]
    %v188 = vld [vmem:[#allocation3 + $0x1a0] sm:$0xff]
    %v189 = vld [vmem:[#allocation3 + $0x1a8] sm:$0xff]
    %v190 = vld [vmem:[#allocation3 + $0x1b0] sm:$0xff]
    %v191 = vld [vmem:[#allocation3 + $0x1b8] sm:$0xff]
    %v192 = vld [vmem:[#allocation3 + $0x1c0] sm:$0xff]
    %v193 = vld [vmem:[#allocation3 + $0x1c8] sm:$0xff]
    %v194 = vld [vmem:[#allocation3 + $0x1d0] sm:$0xff]
    %v195 = vld [vmem:[#allocation3 + $0x1d8] sm:$0xff]
    %v196 = vld [vmem:[#allocation3 + $0x1e0] sm:$0xff]
    %v197 = vld [vmem:[#allocation3 + $0x1e8] sm:$0xff]
    %v198 = vld [vmem:[#allocation3 + $0x1f0] sm:$0xff]
    %v199 = vld [vmem:[#allocation3 + $0x1f8] sm:$0xff]
    %v200 = vld [vmem:[#allocation3 + $0x200] sm:$0xff]
    %v201 = vld [vmem:[#allocation3 + $0x208] sm:$0xff]
    %v202 = vld [vmem:[#allocation3 + $0x210] sm:$0xff]
    %v203 = vld [vmem:[#allocation3 + $0x218] sm:$0xff]
    %v204 = vld [vmem:[#allocation3 + $0x220] sm:$0xff]
    %v205 = vld [vmem:[#allocation3 + $0x228] sm:$0xff]
    %v206 = vld [vmem:[#allocation3 + $0x230] sm:$0xff]
    %v207 = vld [vmem:[#allocation3 + $0x238] sm:$0xff]
    %v208 = vld [vmem:[#allocation3 + $0x240] sm:$0xff]
    %v209 = vld [vmem:[#allocation3 + $0x248] sm:$0xff]
    %v210 = vld [vmem:[#allocation3 + $0x250] sm:$0xff]
    %v211 = vld [vmem:[#allocation3 + $0x258] sm:$0xff]
    %v212 = vld [vmem:[#allocation3 + $0x260] sm:$0xff]
    %v213 = vld [vmem:[#allocation3 + $0x268] sm:$0xff]
    %v214 = vld [vmem:[#allocation3 + $0x270] sm:$0xff]
    %v215 = vld [vmem:[#allocation3 + $0x278] sm:$0xff]
    %v216 = vld [vmem:[#allocation3 + $0x280] sm:$0xff]
    %v217 = vld [vmem:[#allocation3 + $0x288] sm:$0xff]
    %v218 = vld [vmem:[#allocation3 + $0x290] sm:$0xff]
    %v219 = vld [vmem:[#allocation3 + $0x298] sm:$0xff]
    %v220 = vld [vmem:[#allocation3 + $0x2a0] sm:$0xff]
    %v221 = vld [vmem:[#allocation3 + $0x2a8] sm:$0xff]
    %v222 = vld [vmem:[#allocation3 + $0x2b0] sm:$0xff]
    %v223 = vld [vmem:[#allocation3 + $0x2b8] sm:$0xff]
    %v224 = vld [vmem:[#allocation3 + $0x2c0] sm:$0xff]
    %v225 = vld [vmem:[#allocation3 + $0x2c8] sm:$0xff]
    %v226 = vld [vmem:[#allocation3 + $0x2d0] sm:$0xff]
    %v227 = vld [vmem:[#allocation3 + $0x2d8] sm:$0xff]
    %v228 = vld [vmem:[#allocation3 + $0x2e0] sm:$0xff]
    %v229 = vld [vmem:[#allocation3 + $0x2e8] sm:$0xff]
    %v230 = vld [vmem:[#allocation3 + $0x2f0] sm:$0xff]
    %v231 = vld [vmem:[#allocation3 + $0x2f8] sm:$0xff]
    %v232 = vld [vmem:[#allocation3 + $0x300] sm:$0xff]
    %v233 = vld [vmem:[#allocation3 + $0x308] sm:$0xff]
    %v234 = vld [vmem:[#allocation3 + $0x310] sm:$0xff]
    %v235 = vld [vmem:[#allocation3 + $0x318] sm:$0xff]
    %v236 = vld [vmem:[#allocation3 + $0x320] sm:$0xff]
    %v237 = vld [vmem:[#allocation3 + $0x328] sm:$0xff]
    %v238 = vld [vmem:[#allocation3 + $0x330] sm:$0xff]
    %v239 = vld [vmem:[#allocation3 + $0x338] sm:$0xff]
    %v240 = vld [vmem:[#allocation3 + $0x340] sm:$0xff]
    %v241 = vld [vmem:[#allocation3 + $0x348] sm:$0xff]
    %v242 = vld [vmem:[#allocation3 + $0x350] sm:$0xff]
    %v243 = vld [vmem:[#allocation3 + $0x358] sm:$0xff]
    %v244 = vld [vmem:[#allocation3 + $0x360] sm:$0xff]
    %v245 = vld [vmem:[#allocation3 + $0x368] sm:$0xff]
    %v246 = vld [vmem:[#allocation3 + $0x370] sm:$0xff]
    %v247 = vld [vmem:[#allocation3 + $0x378] sm:$0xff]
    %v248 = vld [vmem:[#allocation3 + $0x380] sm:$0xff]
    %v249 = vld [vmem:[#allocation3 + $0x388] sm:$0xff]
    %v250 = vld [vmem:[#allocation3 + $0x390] sm:$0xff]
    %v251 = vld [vmem:[#allocation3 + $0x398] sm:$0xff]
    %v252 = vld [vmem:[#allocation3 + $0x3a0] sm:$0xff]
    %v253 = vld [vmem:[#allocation3 + $0x3a8] sm:$0xff]
    %v254 = vld [vmem:[#allocation3 + $0x3b0] sm:$0xff]
    %v255 = vld [vmem:[#allocation3 + $0x3b8] sm:$0xff]
    %v256 = vld [vmem:[#allocation3 + $0x3c0] sm:$0xff]
    %v257 = vld [vmem:[#allocation3 + $0x3c8] sm:$0xff]
    %v258 = vld [vmem:[#allocation3 + $0x3d0] sm:$0xff]
    %v259 = vld [vmem:[#allocation3 + $0x3d8] sm:$0xff]
    %v260 = vld [vmem:[#allocation3 + $0x3e0] sm:$0xff]
    %v261 = vld [vmem:[#allocation3 + $0x3e8] sm:$0xff]
    %v262 = vld [vmem:[#allocation3 + $0x3f0] sm:$0xff]
    %v263 = vld [vmem:[#allocation3 + $0x3f8] sm:$0xff]
    %v264 = vld [vmem:[#allocation3 + $0x400] sm:$0xff]
    %v265 = vld [vmem:[#allocation3 + $0x408] sm:$0xff]
    %v266 = vld [vmem:[#allocation3 + $0x410] sm:$0xff]
    %v267 = vld [vmem:[#allocation3 + $0x418] sm:$0xff]
    %v268 = vld [vmem:[#allocation3 + $0x420] sm:$0xff]
    %v269 = vld [vmem:[#allocation3 + $0x428] sm:$0xff]
    %v270 = vld [vmem:[#allocation3 + $0x430] sm:$0xff]
    %v271 = vld [vmem:[#allocation3 + $0x438] sm:$0xff]
    %v272 = vld [vmem:[#allocation3 + $0x440] sm:$0xff]
    %v273 = vld [vmem:[#allocation3 + $0x448] sm:$0xff]
    %v274 = vld [vmem:[#allocation3 + $0x450] sm:$0xff]
    %v275 = vld [vmem:[#allocation3 + $0x458] sm:$0xff]
    %v276 = vld [vmem:[#allocation3 + $0x460] sm:$0xff]
    %v277 = vld [vmem:[#allocation3 + $0x468] sm:$0xff]
    %v278 = vld [vmem:[#allocation3 + $0x470] sm:$0xff]
    %v279 = vld [vmem:[#allocation3 + $0x478] sm:$0xff]
    %v280 = vld [vmem:[#allocation3 + $0x480] sm:$0xff]
    %v281 = vld [vmem:[#allocation3 + $0x488] sm:$0xff]
    %v282 = vld [vmem:[#allocation3 + $0x490] sm:$0xff]
    %v283 = vld [vmem:[#allocation3 + $0x498] sm:$0xff]
    %v284 = vld [vmem:[#allocation3 + $0x4a0] sm:$0xff]
    %v285 = vld [vmem:[#allocation3 + $0x4a8] sm:$0xff]
    %v286 = vld [vmem:[#allocation3 + $0x4b0] sm:$0xff]
    %v287 = vld [vmem:[#allocation3 + $0x4b8] sm:$0xff]
    %v288 = vld [vmem:[#allocation3 + $0x4c0] sm:$0xff]
    %v289 = vld [vmem:[#allocation3 + $0x4c8] sm:$0xff]
    %v290 = vld [vmem:[#allocation3 + $0x4d0] sm:$0xff]
    %v291 = vld [vmem:[#allocation3 + $0x4d8] sm:$0xff]
    %v292 = vld [vmem:[#allocation3 + $0x4e0] sm:$0xff]
    %v293 = vld [vmem:[#allocation3 + $0x4e8] sm:$0xff]
    %v294 = vld [vmem:[#allocation3 + $0x4f0] sm:$0xff]
    %v295 = vld [vmem:[#allocation3 + $0x4f8] sm:$0xff]
    %v296 = vld [vmem:[#allocation3 + $0x500] sm:$0xff]
    %v297 = vld [vmem:[#allocation3 + $0x508] sm:$0xff]
    %v298 = vld [vmem:[#allocation3 + $0x510] sm:$0xff]
    %v299 = vld [vmem:[#allocation3 + $0x518] sm:$0xff]
    %v300 = vld [vmem:[#allocation3 + $0x520] sm:$0xff]
    %v301 = vld [vmem:[#allocation3 + $0x528] sm:$0xff]
    %v302 = vld [vmem:[#allocation3 + $0x530] sm:$0xff]
    %v303 = vld [vmem:[#allocation3 + $0x538] sm:$0xff]
    %v304 = vld [vmem:[#allocation3 + $0x540] sm:$0xff]
    %v305 = vld [vmem:[#allocation3 + $0x548] sm:$0xff]
    %v306 = vld [vmem:[#allocation3 + $0x550] sm:$0xff]
    %v307 = vld [vmem:[#allocation3 + $0x558] sm:$0xff]
    %v308 = vld [vmem:[#allocation3 + $0x560] sm:$0xff]
    %v309 = vld [vmem:[#allocation3 + $0x568] sm:$0xff]
    %v310 = vld [vmem:[#allocation3 + $0x570] sm:$0xff]
    %v311 = vld [vmem:[#allocation3 + $0x578] sm:$0xff]
    %v312 = vld [vmem:[#allocation3 + $0x580] sm:$0xff]
    %v313 = vld [vmem:[#allocation3 + $0x588] sm:$0xff]
    %v314 = vld [vmem:[#allocation3 + $0x590] sm:$0xff]
    %v315 = vld [vmem:[#allocation3 + $0x598] sm:$0xff]
    %v316 = vld [vmem:[#allocation3 + $0x5a0] sm:$0xff]
    %v317 = vld [vmem:[#allocation3 + $0x5a8] sm:$0xff]
    %v318 = vld [vmem:[#allocation3 + $0x5b0] sm:$0xff]
    %v319 = vld [vmem:[#allocation3 + $0x5b8] sm:$0xff]
    %v320 = vld [vmem:[#allocation3 + $0x5c0] sm:$0xff]
    %v321 = vld [vmem:[#allocation3 + $0x5c8] sm:$0xff]
    %v322 = vld [vmem:[#allocation3 + $0x5d0] sm:$0xff]
    %v323 = vld [vmem:[#allocation3 + $0x5d8] sm:$0xff]
    %v324 = vld [vmem:[#allocation3 + $0x5e0] sm:$0xff]
    %v325 = vld [vmem:[#allocation3 + $0x5e8] sm:$0xff]
    %v326 = vld [vmem:[#allocation3 + $0x5f0] sm:$0xff]
    %v327 = vld [vmem:[#allocation3 + $0x5f8] sm:$0xff]
    %v328 = vld [vmem:[%s2] sm:$0xf]
    %v330 = vperm.slane %v328, 0
    %v331 = vperm.slane %v328, 1
    %v332 = vperm.slane %v328, 2
    %v333 = vperm.slane %v328, 3
    %v530 = vunpack.c.l.b16 %v136
    %v531 = vunpack.c.h.b16 %v136
    %v532 = vunpack.c.l.b16 %v137
    %v533 = vunpack.c.h.b16 %v137
    %v534 = vunpack.c.l.b16 %v138
    %v535 = vunpack.c.h.b16 %v138
    %v536 = vunpack.c.l.b16 %v139
    %v537 = vunpack.c.h.b16 %v139
    %v538 = vunpack.c.l.b16 %v140
    %v539 = vunpack.c.h.b16 %v140
    %v540 = vunpack.c.l.b16 %v141
    %v541 = vunpack.c.h.b16 %v141
    %v542 = vunpack.c.l.b16 %v142
    %v543 = vunpack.c.h.b16 %v142
    %v544 = vunpack.c.l.b16 %v143
    %v545 = vunpack.c.h.b16 %v143
    %v546 = vunpack.c.l.b16 %v144
    %v547 = vunpack.c.h.b16 %v144
    %v548 = vunpack.c.l.b16 %v145
    %v549 = vunpack.c.h.b16 %v145
    %v550 = vunpack.c.l.b16 %v146
    %v551 = vunpack.c.h.b16 %v146
    %v552 = vunpack.c.l.b16 %v147
    %v553 = vunpack.c.h.b16 %v147
    %v554 = vunpack.c.l.b16 %v148
    %v555 = vunpack.c.h.b16 %v148
    %v556 = vunpack.c.l.b16 %v149
    %v557 = vunpack.c.h.b16 %v149
    %v558 = vunpack.c.l.b16 %v150
    %v559 = vunpack.c.h.b16 %v150
    %v560 = vunpack.c.l.b16 %v151
    %v561 = vunpack.c.h.b16 %v151
    %v562 = vunpack.c.l.b16 %v152
    %v563 = vunpack.c.h.b16 %v152
    %v564 = vunpack.c.l.b16 %v153
    %v565 = vunpack.c.h.b16 %v153
    %v566 = vunpack.c.l.b16 %v154
    %v567 = vunpack.c.h.b16 %v154
    %v568 = vunpack.c.l.b16 %v155
    %v569 = vunpack.c.h.b16 %v155
    %v570 = vunpack.c.l.b16 %v156
    %v571 = vunpack.c.h.b16 %v156
    %v572 = vunpack.c.l.b16 %v157
    %v573 = vunpack.c.h.b16 %v157
    %v574 = vunpack.c.l.b16 %v158
    %v575 = vunpack.c.h.b16 %v158
    %v576 = vunpack.c.l.b16 %v159
    %v577 = vunpack.c.h.b16 %v159
    %v578 = vunpack.c.l.b16 %v160
    %v579 = vunpack.c.h.b16 %v160
    %v580 = vunpack.c.l.b16 %v161
    %v581 = vunpack.c.h.b16 %v161
    %v582 = vunpack.c.l.b16 %v162
    %v583 = vunpack.c.h.b16 %v162
    %v584 = vunpack.c.l.b16 %v163
    %v585 = vunpack.c.h.b16 %v163
    %v586 = vunpack.c.l.b16 %v164
    %v587 = vunpack.c.h.b16 %v164
    %v588 = vunpack.c.l.b16 %v165
    %v589 = vunpack.c.h.b16 %v165
    %v590 = vunpack.c.l.b16 %v166
    %v591 = vunpack.c.h.b16 %v166
    %v592 = vunpack.c.l.b16 %v167
    %v593 = vunpack.c.h.b16 %v167
    %v594 = vunpack.c.l.b16 %v168
    %v595 = vunpack.c.h.b16 %v168
    %v596 = vunpack.c.l.b16 %v169
    %v597 = vunpack.c.h.b16 %v169
    %v598 = vunpack.c.l.b16 %v170
    %v599 = vunpack.c.h.b16 %v170
    %v600 = vunpack.c.l.b16 %v171
    %v601 = vunpack.c.h.b16 %v171
    %v602 = vunpack.c.l.b16 %v172
    %v603 = vunpack.c.h.b16 %v172
    %v604 = vunpack.c.l.b16 %v173
    %v605 = vunpack.c.h.b16 %v173
    %v606 = vunpack.c.l.b16 %v174
    %v607 = vunpack.c.h.b16 %v174
    %v608 = vunpack.c.l.b16 %v175
    %v609 = vunpack.c.h.b16 %v175
    %v610 = vunpack.c.l.b16 %v176
    %v611 = vunpack.c.h.b16 %v176
    %v612 = vunpack.c.l.b16 %v177
    %v613 = vunpack.c.h.b16 %v177
    %v614 = vunpack.c.l.b16 %v178
    %v615 = vunpack.c.h.b16 %v178
    %v616 = vunpack.c.l.b16 %v179
    %v617 = vunpack.c.h.b16 %v179
    %v618 = vunpack.c.l.b16 %v180
    %v619 = vunpack.c.h.b16 %v180
    %v620 = vunpack.c.l.b16 %v181
    %v621 = vunpack.c.h.b16 %v181
    %v622 = vunpack.c.l.b16 %v182
    %v623 = vunpack.c.h.b16 %v182
    %v624 = vunpack.c.l.b16 %v183
    %v625 = vunpack.c.h.b16 %v183
    %v626 = vunpack.c.l.b16 %v184
    %v627 = vunpack.c.h.b16 %v184
    %v628 = vunpack.c.l.b16 %v185
    %v629 = vunpack.c.h.b16 %v185
    %v630 = vunpack.c.l.b16 %v186
    %v631 = vunpack.c.h.b16 %v186
    %v632 = vunpack.c.l.b16 %v187
    %v633 = vunpack.c.h.b16 %v187
    %v634 = vunpack.c.l.b16 %v188
    %v635 = vunpack.c.h.b16 %v188
    %v636 = vunpack.c.l.b16 %v189
    %v637 = vunpack.c.h.b16 %v189
    %v638 = vunpack.c.l.b16 %v190
    %v639 = vunpack.c.h.b16 %v190
    %v640 = vunpack.c.l.b16 %v191
    %v641 = vunpack.c.h.b16 %v191
    %v642 = vunpack.c.l.b16 %v192
    %v643 = vunpack.c.h.b16 %v192
    %v644 = vunpack.c.l.b16 %v193
    %v645 = vunpack.c.h.b16 %v193
    %v646 = vunpack.c.l.b16 %v194
    %v647 = vunpack.c.h.b16 %v194
    %v648 = vunpack.c.l.b16 %v195
    %v649 = vunpack.c.h.b16 %v195
    %v650 = vunpack.c.l.b16 %v196
    %v651 = vunpack.c.h.b16 %v196
    %v652 = vunpack.c.l.b16 %v197
    %v653 = vunpack.c.h.b16 %v197
    %v654 = vunpack.c.l.b16 %v198
    %v655 = vunpack.c.h.b16 %v198
    %v656 = vunpack.c.l.b16 %v199
    %v657 = vunpack.c.h.b16 %v199
    %v658 = vunpack.c.l.b16 %v200
    %v659 = vunpack.c.h.b16 %v200
    %v660 = vunpack.c.l.b16 %v201
    %v661 = vunpack.c.h.b16 %v201
    %v662 = vunpack.c.l.b16 %v202
    %v663 = vunpack.c.h.b16 %v202
    %v664 = vunpack.c.l.b16 %v203
    %v665 = vunpack.c.h.b16 %v203
    %v666 = vunpack.c.l.b16 %v204
    %v667 = vunpack.c.h.b16 %v204
    %v668 = vunpack.c.l.b16 %v205
    %v669 = vunpack.c.h.b16 %v205
    %v670 = vunpack.c.l.b16 %v206
    %v671 = vunpack.c.h.b16 %v206
    %v672 = vunpack.c.l.b16 %v207
    %v673 = vunpack.c.h.b16 %v207
    %v674 = vunpack.c.l.b16 %v208
    %v675 = vunpack.c.h.b16 %v208
    %v676 = vunpack.c.l.b16 %v209
    %v677 = vunpack.c.h.b16 %v209
    %v678 = vunpack.c.l.b16 %v210
    %v679 = vunpack.c.h.b16 %v210
    %v680 = vunpack.c.l.b16 %v211
    %v681 = vunpack.c.h.b16 %v211
    %v682 = vunpack.c.l.b16 %v212
    %v683 = vunpack.c.h.b16 %v212
    %v684 = vunpack.c.l.b16 %v213
    %v685 = vunpack.c.h.b16 %v213
    %v686 = vunpack.c.l.b16 %v214
    %v687 = vunpack.c.h.b16 %v214
    %v688 = vunpack.c.l.b16 %v215
    %v689 = vunpack.c.h.b16 %v215
    %v690 = vunpack.c.l.b16 %v216
    %v691 = vunpack.c.h.b16 %v216
    %v692 = vunpack.c.l.b16 %v217
    %v693 = vunpack.c.h.b16 %v217
    %v694 = vunpack.c.l.b16 %v218
    %v695 = vunpack.c.h.b16 %v218
    %v696 = vunpack.c.l.b16 %v219
    %v697 = vunpack.c.h.b16 %v219
    %v698 = vunpack.c.l.b16 %v220
    %v699 = vunpack.c.h.b16 %v220
    %v700 = vunpack.c.l.b16 %v221
    %v701 = vunpack.c.h.b16 %v221
    %v702 = vunpack.c.l.b16 %v222
    %v703 = vunpack.c.h.b16 %v222
    %v704 = vunpack.c.l.b16 %v223
    %v705 = vunpack.c.h.b16 %v223
    %v706 = vunpack.c.l.b16 %v224
    %v707 = vunpack.c.h.b16 %v224
    %v708 = vunpack.c.l.b16 %v225
    %v709 = vunpack.c.h.b16 %v225
    %v710 = vunpack.c.l.b16 %v226
    %v711 = vunpack.c.h.b16 %v226
    %v712 = vunpack.c.l.b16 %v227
    %v713 = vunpack.c.h.b16 %v227
    %v714 = vunpack.c.l.b16 %v228
    %v715 = vunpack.c.h.b16 %v228
    %v716 = vunpack.c.l.b16 %v229
    %v717 = vunpack.c.h.b16 %v229
    %v718 = vunpack.c.l.b16 %v230
    %v719 = vunpack.c.h.b16 %v230
    %v720 = vunpack.c.l.b16 %v231
    %v721 = vunpack.c.h.b16 %v231
    %v722 = vunpack.c.l.b16 %v232
    %v723 = vunpack.c.h.b16 %v232
    %v724 = vunpack.c.l.b16 %v233
    %v725 = vunpack.c.h.b16 %v233
    %v726 = vunpack.c.l.b16 %v234
    %v727 = vunpack.c.h.b16 %v234
    %v728 = vunpack.c.l.b16 %v235
    %v729 = vunpack.c.h.b16 %v235
    %v730 = vunpack.c.l.b16 %v236
    %v731 = vunpack.c.h.b16 %v236
    %v732 = vunpack.c.l.b16 %v237
    %v733 = vunpack.c.h.b16 %v237
    %v734 = vunpack.c.l.b16 %v238
    %v735 = vunpack.c.h.b16 %v238
    %v736 = vunpack.c.l.b16 %v239
    %v737 = vunpack.c.h.b16 %v239
    %v738 = vunpack.c.l.b16 %v240
    %v739 = vunpack.c.h.b16 %v240
    %v740 = vunpack.c.l.b16 %v241
    %v741 = vunpack.c.h.b16 %v241
    %v742 = vunpack.c.l.b16 %v242
    %v743 = vunpack.c.h.b16 %v242
    %v744 = vunpack.c.l.b16 %v243
    %v745 = vunpack.c.h.b16 %v243
    %v746 = vunpack.c.l.b16 %v244
    %v747 = vunpack.c.h.b16 %v244
    %v748 = vunpack.c.l.b16 %v245
    %v749 = vunpack.c.h.b16 %v245
    %v750 = vunpack.c.l.b16 %v246
    %v751 = vunpack.c.h.b16 %v246
    %v752 = vunpack.c.l.b16 %v247
    %v753 = vunpack.c.h.b16 %v247
    %v754 = vunpack.c.l.b16 %v248
    %v755 = vunpack.c.h.b16 %v248
    %v756 = vunpack.c.l.b16 %v249
    %v757 = vunpack.c.h.b16 %v249
    %v758 = vunpack.c.l.b16 %v250
    %v759 = vunpack.c.h.b16 %v250
    %v760 = vunpack.c.l.b16 %v251
    %v761 = vunpack.c.h.b16 %v251
    %v762 = vunpack.c.l.b16 %v252
    %v763 = vunpack.c.h.b16 %v252
    %v764 = vunpack.c.l.b16 %v253
    %v765 = vunpack.c.h.b16 %v253
    %v766 = vunpack.c.l.b16 %v254
    %v767 = vunpack.c.h.b16 %v254
    %v768 = vunpack.c.l.b16 %v255
    %v769 = vunpack.c.h.b16 %v255
    %v770 = vunpack.c.l.b16 %v256
    %v771 = vunpack.c.h.b16 %v256
    %v772 = vunpack.c.l.b16 %v257
    %v773 = vunpack.c.h.b16 %v257
    %v774 = vunpack.c.l.b16 %v258
    %v775 = vunpack.c.h.b16 %v258
    %v776 = vunpack.c.l.b16 %v259
    %v777 = vunpack.c.h.b16 %v259
    %v778 = vunpack.c.l.b16 %v260
    %v779 = vunpack.c.h.b16 %v260
    %v780 = vunpack.c.l.b16 %v261
    %v781 = vunpack.c.h.b16 %v261
    %v782 = vunpack.c.l.b16 %v262
    %v783 = vunpack.c.h.b16 %v262
    %v784 = vunpack.c.l.b16 %v263
    %v785 = vunpack.c.h.b16 %v263
    %v786 = vunpack.c.l.b16 %v264
    %v787 = vunpack.c.h.b16 %v264
    %v788 = vunpack.c.l.b16 %v265
    %v789 = vunpack.c.h.b16 %v265
    %v790 = vunpack.c.l.b16 %v266
    %v791 = vunpack.c.h.b16 %v266
    %v792 = vunpack.c.l.b16 %v267
    %v793 = vunpack.c.h.b16 %v267
    %v794 = vunpack.c.l.b16 %v268
    %v795 = vunpack.c.h.b16 %v268
    %v796 = vunpack.c.l.b16 %v269
    %v797 = vunpack.c.h.b16 %v269
    %v798 = vunpack.c.l.b16 %v270
    %v799 = vunpack.c.h.b16 %v270
    %v800 = vunpack.c.l.b16 %v271
    %v801 = vunpack.c.h.b16 %v271
    %v802 = vunpack.c.l.b16 %v272
    %v803 = vunpack.c.h.b16 %v272
    %v804 = vunpack.c.l.b16 %v273
    %v805 = vunpack.c.h.b16 %v273
    %v806 = vunpack.c.l.b16 %v274
    %v807 = vunpack.c.h.b16 %v274
    %v808 = vunpack.c.l.b16 %v275
    %v809 = vunpack.c.h.b16 %v275
    %v810 = vunpack.c.l.b16 %v276
    %v811 = vunpack.c.h.b16 %v276
    %v812 = vunpack.c.l.b16 %v277
    %v813 = vunpack.c.h.b16 %v277
    %v814 = vunpack.c.l.b16 %v278
    %v815 = vunpack.c.h.b16 %v278
    %v816 = vunpack.c.l.b16 %v279
    %v817 = vunpack.c.h.b16 %v279
    %v818 = vunpack.c.l.b16 %v280
    %v819 = vunpack.c.h.b16 %v280
    %v820 = vunpack.c.l.b16 %v281
    %v821 = vunpack.c.h.b16 %v281
    %v822 = vunpack.c.l.b16 %v282
    %v823 = vunpack.c.h.b16 %v282
    %v824 = vunpack.c.l.b16 %v283
    %v825 = vunpack.c.h.b16 %v283
    %v826 = vunpack.c.l.b16 %v284
    %v827 = vunpack.c.h.b16 %v284
    %v828 = vunpack.c.l.b16 %v285
    %v829 = vunpack.c.h.b16 %v285
    %v830 = vunpack.c.l.b16 %v286
    %v831 = vunpack.c.h.b16 %v286
    %v832 = vunpack.c.l.b16 %v287
    %v833 = vunpack.c.h.b16 %v287
    %v834 = vunpack.c.l.b16 %v288
    %v835 = vunpack.c.h.b16 %v288
    %v836 = vunpack.c.l.b16 %v289
    %v837 = vunpack.c.h.b16 %v289
    %v838 = vunpack.c.l.b16 %v290
    %v839 = vunpack.c.h.b16 %v290
    %v840 = vunpack.c.l.b16 %v291
    %v841 = vunpack.c.h.b16 %v291
    %v842 = vunpack.c.l.b16 %v292
    %v843 = vunpack.c.h.b16 %v292
    %v844 = vunpack.c.l.b16 %v293
    %v845 = vunpack.c.h.b16 %v293
    %v846 = vunpack.c.l.b16 %v294
    %v847 = vunpack.c.h.b16 %v294
    %v848 = vunpack.c.l.b16 %v295
    %v849 = vunpack.c.h.b16 %v295
    %v850 = vunpack.c.l.b16 %v296
    %v851 = vunpack.c.h.b16 %v296
    %v852 = vunpack.c.l.b16 %v297
    %v853 = vunpack.c.h.b16 %v297
    %v854 = vunpack.c.l.b16 %v298
    %v855 = vunpack.c.h.b16 %v298
    %v856 = vunpack.c.l.b16 %v299
    %v857 = vunpack.c.h.b16 %v299
    %v858 = vunpack.c.l.b16 %v300
    %v859 = vunpack.c.h.b16 %v300
    %v860 = vunpack.c.l.b16 %v301
    %v861 = vunpack.c.h.b16 %v301
    %v862 = vunpack.c.l.b16 %v302
    %v863 = vunpack.c.h.b16 %v302
    %v864 = vunpack.c.l.b16 %v303
    %v865 = vunpack.c.h.b16 %v303
    %v866 = vunpack.c.l.b16 %v304
    %v867 = vunpack.c.h.b16 %v304
    %v868 = vunpack.c.l.b16 %v305
    %v869 = vunpack.c.h.b16 %v305
    %v870 = vunpack.c.l.b16 %v306
    %v871 = vunpack.c.h.b16 %v306
    %v872 = vunpack.c.l.b16 %v307
    %v873 = vunpack.c.h.b16 %v307
    %v874 = vunpack.c.l.b16 %v308
    %v875 = vunpack.c.h.b16 %v308
    %v876 = vunpack.c.l.b16 %v309
    %v877 = vunpack.c.h.b16 %v309
    %v878 = vunpack.c.l.b16 %v310
    %v879 = vunpack.c.h.b16 %v310
    %v880 = vunpack.c.l.b16 %v311
    %v881 = vunpack.c.h.b16 %v311
    %v882 = vunpack.c.l.b16 %v312
    %v883 = vunpack.c.h.b16 %v312
    %v884 = vunpack.c.l.b16 %v313
    %v885 = vunpack.c.h.b16 %v313
    %v886 = vunpack.c.l.b16 %v314
    %v887 = vunpack.c.h.b16 %v314
    %v888 = vunpack.c.l.b16 %v315
    %v889 = vunpack.c.h.b16 %v315
    %v890 = vunpack.c.l.b16 %v316
    %v891 = vunpack.c.h.b16 %v316
    %v892 = vunpack.c.l.b16 %v317
    %v893 = vunpack.c.h.b16 %v317
    %v894 = vunpack.c.l.b16 %v318
    %v895 = vunpack.c.h.b16 %v318
    %v896 = vunpack.c.l.b16 %v319
    %v897 = vunpack.c.h.b16 %v319
    %v898 = vunpack.c.l.b16 %v320
    %v899 = vunpack.c.h.b16 %v320
    %v900 = vunpack.c.l.b16 %v321
    %v901 = vunpack.c.h.b16 %v321
    %v902 = vunpack.c.l.b16 %v322
    %v903 = vunpack.c.h.b16 %v322
    %v904 = vunpack.c.l.b16 %v323
    %v905 = vunpack.c.h.b16 %v323
    %v906 = vunpack.c.l.b16 %v324
    %v907 = vunpack.c.h.b16 %v324
    %v908 = vunpack.c.l.b16 %v325
    %v909 = vunpack.c.h.b16 %v325
    %v910 = vunpack.c.l.b16 %v326
    %v911 = vunpack.c.h.b16 %v326
    %v912 = vunpack.c.l.b16 %v327
    %v913 = vunpack.c.h.b16 %v327
    %v914 = vpack.c.b16 %v534, %v530
    %v915 = vpack.c.b16 %v535, %v531
    %v916 = vpack.c.b16 %v536, %v532
    %v917 = vpack.c.b16 %v537, %v533
    %v918 = vpack.c.b16 %v542, %v538
    %v919 = vpack.c.b16 %v543, %v539
    %v920 = vpack.c.b16 %v544, %v540
    %v921 = vpack.c.b16 %v545, %v541
    %v922 = vpack.c.b16 %v550, %v546
    %v923 = vpack.c.b16 %v551, %v547
    %v924 = vpack.c.b16 %v552, %v548
    %v925 = vpack.c.b16 %v553, %v549
    %v926 = vpack.c.b16 %v558, %v554
    %v927 = vpack.c.b16 %v559, %v555
    %v928 = vpack.c.b16 %v560, %v556
    %v929 = vpack.c.b16 %v561, %v557
    %v930 = vpack.c.b16 %v566, %v562
    %v931 = vpack.c.b16 %v567, %v563
    %v932 = vpack.c.b16 %v568, %v564
    %v933 = vpack.c.b16 %v569, %v565
    %v934 = vpack.c.b16 %v574, %v570
    %v935 = vpack.c.b16 %v575, %v571
    %v936 = vpack.c.b16 %v576, %v572
    %v937 = vpack.c.b16 %v577, %v573
    %v938 = vpack.c.b16 %v582, %v578
    %v939 = vpack.c.b16 %v583, %v579
    %v940 = vpack.c.b16 %v584, %v580
    %v941 = vpack.c.b16 %v585, %v581
    %v942 = vpack.c.b16 %v590, %v586
    %v943 = vpack.c.b16 %v591, %v587
    %v944 = vpack.c.b16 %v592, %v588
    %v945 = vpack.c.b16 %v593, %v589
    %v946 = vpack.c.b16 %v598, %v594
    %v947 = vpack.c.b16 %v599, %v595
    %v948 = vpack.c.b16 %v600, %v596
    %v949 = vpack.c.b16 %v601, %v597
    %v950 = vpack.c.b16 %v606, %v602
    %v951 = vpack.c.b16 %v607, %v603
    %v952 = vpack.c.b16 %v608, %v604
    %v953 = vpack.c.b16 %v609, %v605
    %v954 = vpack.c.b16 %v614, %v610
    %v955 = vpack.c.b16 %v615, %v611
    %v956 = vpack.c.b16 %v616, %v612
    %v957 = vpack.c.b16 %v617, %v613
    %v958 = vpack.c.b16 %v622, %v618
    %v959 = vpack.c.b16 %v623, %v619
    %v960 = vpack.c.b16 %v624, %v620
    %v961 = vpack.c.b16 %v625, %v621
    %v962 = vpack.c.b16 %v630, %v626
    %v963 = vpack.c.b16 %v631, %v627
    %v964 = vpack.c.b16 %v632, %v628
    %v965 = vpack.c.b16 %v633, %v629
    %v966 = vpack.c.b16 %v638, %v634
    %v967 = vpack.c.b16 %v639, %v635
    %v968 = vpack.c.b16 %v640, %v636
    %v969 = vpack.c.b16 %v641, %v637
    %v970 = vpack.c.b16 %v646, %v642
    %v971 = vpack.c.b16 %v647, %v643
    %v972 = vpack.c.b16 %v648, %v644
    %v973 = vpack.c.b16 %v649, %v645
    %v974 = vpack.c.b16 %v654, %v650
    %v975 = vpack.c.b16 %v655, %v651
    %v976 = vpack.c.b16 %v656, %v652
    %v977 = vpack.c.b16 %v657, %v653
    %v978 = vpack.c.b16 %v662, %v658
    %v979 = vpack.c.b16 %v663, %v659
    %v980 = vpack.c.b16 %v664, %v660
    %v981 = vpack.c.b16 %v665, %v661
    %v982 = vpack.c.b16 %v670, %v666
    %v983 = vpack.c.b16 %v671, %v667
    %v984 = vpack.c.b16 %v672, %v668
    %v985 = vpack.c.b16 %v673, %v669
    %v986 = vpack.c.b16 %v678, %v674
    %v987 = vpack.c.b16 %v679, %v675
    %v988 = vpack.c.b16 %v680, %v676
    %v989 = vpack.c.b16 %v681, %v677
    %v990 = vpack.c.b16 %v686, %v682
    %v991 = vpack.c.b16 %v687, %v683
    %v992 = vpack.c.b16 %v688, %v684
    %v993 = vpack.c.b16 %v689, %v685
    %v994 = vpack.c.b16 %v694, %v690
    %v995 = vpack.c.b16 %v695, %v691
    %v996 = vpack.c.b16 %v696, %v692
    %v997 = vpack.c.b16 %v697, %v693
    %v998 = vpack.c.b16 %v702, %v698
    %v999 = vpack.c.b16 %v703, %v699
    %v1000 = vpack.c.b16 %v704, %v700
    %v1001 = vpack.c.b16 %v705, %v701
    %v1002 = vpack.c.b16 %v710, %v706
    %v1003 = vpack.c.b16 %v711, %v707
    %v1004 = vpack.c.b16 %v712, %v708
    %v1005 = vpack.c.b16 %v713, %v709
    %v1006 = vpack.c.b16 %v718, %v714
    %v1007 = vpack.c.b16 %v719, %v715
    %v1008 = vpack.c.b16 %v720, %v716
    %v1009 = vpack.c.b16 %v721, %v717
    %v1010 = vpack.c.b16 %v726, %v722
    %v1011 = vpack.c.b16 %v727, %v723
    %v1012 = vpack.c.b16 %v728, %v724
    %v1013 = vpack.c.b16 %v729, %v725
    %v1014 = vpack.c.b16 %v734, %v730
    %v1015 = vpack.c.b16 %v735, %v731
    %v1016 = vpack.c.b16 %v736, %v732
    %v1017 = vpack.c.b16 %v737, %v733
    %v1018 = vpack.c.b16 %v742, %v738
    %v1019 = vpack.c.b16 %v743, %v739
    %v1020 = vpack.c.b16 %v744, %v740
    %v1021 = vpack.c.b16 %v745, %v741
    %v1022 = vpack.c.b16 %v750, %v746
    %v1023 = vpack.c.b16 %v751, %v747
    %v1024 = vpack.c.b16 %v752, %v748
    %v1025 = vpack.c.b16 %v753, %v749
    %v1026 = vpack.c.b16 %v758, %v754
    %v1027 = vpack.c.b16 %v759, %v755
    %v1028 = vpack.c.b16 %v760, %v756
    %v1029 = vpack.c.b16 %v761, %v757
    %v1030 = vpack.c.b16 %v766, %v762
    %v1031 = vpack.c.b16 %v767, %v763
    %v1032 = vpack.c.b16 %v768, %v764
    %v1033 = vpack.c.b16 %v769, %v765
    %v1034 = vpack.c.b16 %v774, %v770
    %v1035 = vpack.c.b16 %v775, %v771
    %v1036 = vpack.c.b16 %v776, %v772
    %v1037 = vpack.c.b16 %v777, %v773
    %v1038 = vpack.c.b16 %v782, %v778
    %v1039 = vpack.c.b16 %v783, %v779
    %v1040 = vpack.c.b16 %v784, %v780
    %v1041 = vpack.c.b16 %v785, %v781
    %v1042 = vpack.c.b16 %v790, %v786
    %v1043 = vpack.c.b16 %v791, %v787
    %v1044 = vpack.c.b16 %v792, %v788
    %v1045 = vpack.c.b16 %v793, %v789
    %v1046 = vpack.c.b16 %v798, %v794
    %v1047 = vpack.c.b16 %v799, %v795
    %v1048 = vpack.c.b16 %v800, %v796
    %v1049 = vpack.c.b16 %v801, %v797
    %v1050 = vpack.c.b16 %v806, %v802
    %v1051 = vpack.c.b16 %v807, %v803
    %v1052 = vpack.c.b16 %v808, %v804
    %v1053 = vpack.c.b16 %v809, %v805
    %v1054 = vpack.c.b16 %v814, %v810
    %v1055 = vpack.c.b16 %v815, %v811
    %v1056 = vpack.c.b16 %v816, %v812
    %v1057 = vpack.c.b16 %v817, %v813
    %v1058 = vpack.c.b16 %v822, %v818
    %v1059 = vpack.c.b16 %v823, %v819
    %v1060 = vpack.c.b16 %v824, %v820
    %v1061 = vpack.c.b16 %v825, %v821
    %v1062 = vpack.c.b16 %v830, %v826
    %v1063 = vpack.c.b16 %v831, %v827
    %v1064 = vpack.c.b16 %v832, %v828
    %v1065 = vpack.c.b16 %v833, %v829
    %v1066 = vpack.c.b16 %v838, %v834
    %v1067 = vpack.c.b16 %v839, %v835
    %v1068 = vpack.c.b16 %v840, %v836
    %v1069 = vpack.c.b16 %v841, %v837
    %v1070 = vpack.c.b16 %v846, %v842
    %v1071 = vpack.c.b16 %v847, %v843
    %v1072 = vpack.c.b16 %v848, %v844
    %v1073 = vpack.c.b16 %v849, %v845
    %v1074 = vpack.c.b16 %v854, %v850
    %v1075 = vpack.c.b16 %v855, %v851
    %v1076 = vpack.c.b16 %v856, %v852
    %v1077 = vpack.c.b16 %v857, %v853
    %v1078 = vpack.c.b16 %v862, %v858
    %v1079 = vpack.c.b16 %v863, %v859
    %v1080 = vpack.c.b16 %v864, %v860
    %v1081 = vpack.c.b16 %v865, %v861
    %v1082 = vpack.c.b16 %v870, %v866
    %v1083 = vpack.c.b16 %v871, %v867
    %v1084 = vpack.c.b16 %v872, %v868
    %v1085 = vpack.c.b16 %v873, %v869
    %v1086 = vpack.c.b16 %v878, %v874
    %v1087 = vpack.c.b16 %v879, %v875
    %v1088 = vpack.c.b16 %v880, %v876
    %v1089 = vpack.c.b16 %v881, %v877
    %v1090 = vpack.c.b16 %v886, %v882
    %v1091 = vpack.c.b16 %v887, %v883
    %v1092 = vpack.c.b16 %v888, %v884
    %v1093 = vpack.c.b16 %v889, %v885
    %v1094 = vpack.c.b16 %v894, %v890
    %v1095 = vpack.c.b16 %v895, %v891
    %v1096 = vpack.c.b16 %v896, %v892
    %v1097 = vpack.c.b16 %v897, %v893
    %v1098 = vpack.c.b16 %v902, %v898
    %v1099 = vpack.c.b16 %v903, %v899
    %v1100 = vpack.c.b16 %v904, %v900
    %v1101 = vpack.c.b16 %v905, %v901
    %v1102 = vpack.c.b16 %v910, %v906
    %v1103 = vpack.c.b16 %v911, %v907
    %v1104 = vpack.c.b16 %v912, %v908
    %v1105 = vpack.c.b16 %v913, %v909
    %1298 = vmatpush.bf16.msra.mxu0 %v942
    %1299 = vmatpush.bf16.msra.mxu0 %v938
    %1300 = vmatpush.bf16.msra.mxu0 %v934
    %1301 = vmatpush.bf16.msra.mxu0 %v930
    %1302 = vmatpush.bf16.msra.mxu0 %v926
    %1303 = vmatpush.bf16.msra.mxu0 %v922
    %1304 = vmatpush.bf16.msra.mxu0 %v918
    %1305 = vmatpush.bf16.msra.mxu0 %v914
    %1306 = vmatmul.bf16.gmra.mxu0 %v130
    %v1307 = vpop.f32.mrf.mxu0
    %v1308 = vadd.f32 %v330, %v1307
    %v1309 = vpop.f32.mrf.mxu0
    %1310 = vdwg.mxu0
    %1311 = vmatpush.bf16.msra.mxu0 %v974
    %1312 = vmatpush.bf16.msra.mxu0 %v970
    %1313 = vmatpush.bf16.msra.mxu0 %v966
    %1314 = vmatpush.bf16.msra.mxu0 %v962
    %1315 = vmatpush.bf16.msra.mxu0 %v958
    %1316 = vmatpush.bf16.msra.mxu0 %v954
    %1317 = vmatpush.bf16.msra.mxu0 %v950
    %1318 = vmatpush.bf16.msra.mxu0 %v946
    %1319 = vmatmul.bf16.gmra.mxu0 %v131
    %v1320 = vpop.f32.mrf.mxu0
    %v1321 = vadd.f32 %v1308, %v1320
    %v1322 = vpop.f32.mrf.mxu0
    %1323 = vdwg.mxu0
    %1324 = vmatpush.bf16.msra.mxu0 %v1006
    %1325 = vmatpush.bf16.msra.mxu0 %v1002
    %1326 = vmatpush.bf16.msra.mxu0 %v998
    %1327 = vmatpush.bf16.msra.mxu0 %v994
    %1328 = vmatpush.bf16.msra.mxu0 %v990
    %1329 = vmatpush.bf16.msra.mxu0 %v986
    %1330 = vmatpush.bf16.msra.mxu0 %v982
    %1331 = vmatpush.bf16.msra.mxu0 %v978
    %1332 = vmatmul.bf16.gmra.mxu0 %v132
    %v1333 = vpop.f32.mrf.mxu0
    %v1334 = vadd.f32 %v1321, %v1333
    %v1335 = vpop.f32.mrf.mxu0
    %1336 = vdwg.mxu0
    %1337 = vmatpush.bf16.msra.mxu0 %v1038
    %1338 = vmatpush.bf16.msra.mxu0 %v1034
    %1339 = vmatpush.bf16.msra.mxu0 %v1030
    %1340 = vmatpush.bf16.msra.mxu0 %v1026
    %1341 = vmatpush.bf16.msra.mxu0 %v1022
    %1342 = vmatpush.bf16.msra.mxu0 %v1018
    %1343 = vmatpush.bf16.msra.mxu0 %v1014
    %1344 = vmatpush.bf16.msra.mxu0 %v1010
    %1345 = vmatmul.bf16.gmra.mxu0 %v133
    %v1346 = vpop.f32.mrf.mxu0
    %v1347 = vadd.f32 %v1334, %v1346
    %v1348 = vpop.f32.mrf.mxu0
    %1349 = vdwg.mxu0
    %1350 = vmatpush.bf16.msra.mxu0 %v1070
    %1351 = vmatpush.bf16.msra.mxu0 %v1066
    %1352 = vmatpush.bf16.msra.mxu0 %v1062
    %1353 = vmatpush.bf16.msra.mxu0 %v1058
    %1354 = vmatpush.bf16.msra.mxu0 %v1054
    %1355 = vmatpush.bf16.msra.mxu0 %v1050
    %1356 = vmatpush.bf16.msra.mxu0 %v1046
    %1357 = vmatpush.bf16.msra.mxu0 %v1042
    %1358 = vmatmul.bf16.gmra.mxu0 %v134
    %v1359 = vpop.f32.mrf.mxu0
    %v1360 = vadd.f32 %v1347, %v1359
    %v1361 = vpop.f32.mrf.mxu0
    %1362 = vdwg.mxu0
    %1363 = vmatpush.bf16.msra.mxu0 %v1102
    %1364 = vmatpush.bf16.msra.mxu0 %v1098
    %1365 = vmatpush.bf16.msra.mxu0 %v1094
    %1366 = vmatpush.bf16.msra.mxu0 %v1090
    %1367 = vmatpush.bf16.msra.mxu0 %v1086
    %1368 = vmatpush.bf16.msra.mxu0 %v1082
    %1369 = vmatpush.bf16.msra.mxu0 %v1078
    %1370 = vmatpush.bf16.msra.mxu0 %v1074
    %1371 = vmatmul.bf16.gmra.mxu0 %v135
    %v1372 = vpop.f32.mrf.mxu0
    %v1373 = vadd.f32 %v1360, %v1372
    %v1374 = vpop.f32.mrf.mxu0
    %1375 = vdwg.mxu0
    %1376 = vmatpush.bf16.msra.mxu0 %v943
    %1377 = vmatpush.bf16.msra.mxu0 %v939
    %1378 = vmatpush.bf16.msra.mxu0 %v935
    %1379 = vmatpush.bf16.msra.mxu0 %v931
    %1380 = vmatpush.bf16.msra.mxu0 %v927
    %1381 = vmatpush.bf16.msra.mxu0 %v923
    %1382 = vmatpush.bf16.msra.mxu0 %v919
    %1383 = vmatpush.bf16.msra.mxu0 %v915
    %1384 = vmatmul.bf16.gmra.mxu0 %v130
    %v1385 = vpop.f32.mrf.mxu0
    %v1386 = vadd.f32 %v331, %v1385
    %v1387 = vpop.f32.mrf.mxu0
    %1388 = vdwg.mxu0
    %1389 = vmatpush.bf16.msra.mxu0 %v975
    %1390 = vmatpush.bf16.msra.mxu0 %v971
    %1391 = vmatpush.bf16.msra.mxu0 %v967
    %1392 = vmatpush.bf16.msra.mxu0 %v963
    %1393 = vmatpush.bf16.msra.mxu0 %v959
    %1394 = vmatpush.bf16.msra.mxu0 %v955
    %1395 = vmatpush.bf16.msra.mxu0 %v951
    %1396 = vmatpush.bf16.msra.mxu0 %v947
    %1397 = vmatmul.bf16.gmra.mxu0 %v131
    %v1398 = vpop.f32.mrf.mxu0
    %v1399 = vadd.f32 %v1386, %v1398
    %v1400 = vpop.f32.mrf.mxu0
    %1401 = vdwg.mxu0
    %1402 = vmatpush.bf16.msra.mxu0 %v1007
    %1403 = vmatpush.bf16.msra.mxu0 %v1003
    %1404 = vmatpush.bf16.msra.mxu0 %v999
    %1405 = vmatpush.bf16.msra.mxu0 %v995
    %1406 = vmatpush.bf16.msra.mxu0 %v991
    %1407 = vmatpush.bf16.msra.mxu0 %v987
    %1408 = vmatpush.bf16.msra.mxu0 %v983
    %1409 = vmatpush.bf16.msra.mxu0 %v979
    %1410 = vmatmul.bf16.gmra.mxu0 %v132
    %v1411 = vpop.f32.mrf.mxu0
    %v1412 = vadd.f32 %v1399, %v1411
    %v1413 = vpop.f32.mrf.mxu0
    %1414 = vdwg.mxu0
    %1415 = vmatpush.bf16.msra.mxu0 %v1039
    %1416 = vmatpush.bf16.msra.mxu0 %v1035
    %1417 = vmatpush.bf16.msra.mxu0 %v1031
    %1418 = vmatpush.bf16.msra.mxu0 %v1027
    %1419 = vmatpush.bf16.msra.mxu0 %v1023
    %1420 = vmatpush.bf16.msra.mxu0 %v1019
    %1421 = vmatpush.bf16.msra.mxu0 %v1015
    %1422 = vmatpush.bf16.msra.mxu0 %v1011
    %1423 = vmatmul.bf16.gmra.mxu0 %v133
    %v1424 = vpop.f32.mrf.mxu0
    %v1425 = vadd.f32 %v1412, %v1424
    %v1426 = vpop.f32.mrf.mxu0
    %1427 = vdwg.mxu0
    %1428 = vmatpush.bf16.msra.mxu0 %v1071
    %1429 = vmatpush.bf16.msra.mxu0 %v1067
    %1430 = vmatpush.bf16.msra.mxu0 %v1063
    %1431 = vmatpush.bf16.msra.mxu0 %v1059
    %1432 = vmatpush.bf16.msra.mxu0 %v1055
    %1433 = vmatpush.bf16.msra.mxu0 %v1051
    %1434 = vmatpush.bf16.msra.mxu0 %v1047
    %1435 = vmatpush.bf16.msra.mxu0 %v1043
    %1436 = vmatmul.bf16.gmra.mxu0 %v134
    %v1437 = vpop.f32.mrf.mxu0
    %v1438 = vadd.f32 %v1425, %v1437
    %v1439 = vpop.f32.mrf.mxu0
    %1440 = vdwg.mxu0
    %1441 = vmatpush.bf16.msra.mxu0 %v1103
    %1442 = vmatpush.bf16.msra.mxu0 %v1099
    %1443 = vmatpush.bf16.msra.mxu0 %v1095
    %1444 = vmatpush.bf16.msra.mxu0 %v1091
    %1445 = vmatpush.bf16.msra.mxu0 %v1087
    %1446 = vmatpush.bf16.msra.mxu0 %v1083
    %1447 = vmatpush.bf16.msra.mxu0 %v1079
    %1448 = vmatpush.bf16.msra.mxu0 %v1075
    %1449 = vmatmul.bf16.gmra.mxu0 %v135
    %v1450 = vpop.f32.mrf.mxu0
    %v1451 = vadd.f32 %v1438, %v1450
    %v1452 = vpop.f32.mrf.mxu0
    %1453 = vdwg.mxu0
    %1454 = vmatpush.bf16.msra.mxu0 %v944
    %1455 = vmatpush.bf16.msra.mxu0 %v940
    %1456 = vmatpush.bf16.msra.mxu0 %v936
    %1457 = vmatpush.bf16.msra.mxu0 %v932
    %1458 = vmatpush.bf16.msra.mxu0 %v928
    %1459 = vmatpush.bf16.msra.mxu0 %v924
    %1460 = vmatpush.bf16.msra.mxu0 %v920
    %1461 = vmatpush.bf16.msra.mxu0 %v916
    %1462 = vmatmul.bf16.gmra.mxu0 %v130
    %v1463 = vpop.f32.mrf.mxu0
    %v1464 = vadd.f32 %v332, %v1463
    %v1465 = vpop.f32.mrf.mxu0
    %1466 = vdwg.mxu0
    %1467 = vmatpush.bf16.msra.mxu0 %v976
    %1468 = vmatpush.bf16.msra.mxu0 %v972
    %1469 = vmatpush.bf16.msra.mxu0 %v968
    %1470 = vmatpush.bf16.msra.mxu0 %v964
    %1471 = vmatpush.bf16.msra.mxu0 %v960
    %1472 = vmatpush.bf16.msra.mxu0 %v956
    %1473 = vmatpush.bf16.msra.mxu0 %v952
    %1474 = vmatpush.bf16.msra.mxu0 %v948
    %1475 = vmatmul.bf16.gmra.mxu0 %v131
    %v1476 = vpop.f32.mrf.mxu0
    %v1477 = vadd.f32 %v1464, %v1476
    %v1478 = vpop.f32.mrf.mxu0
    %1479 = vdwg.mxu0
    %1480 = vmatpush.bf16.msra.mxu0 %v1008
    %1481 = vmatpush.bf16.msra.mxu0 %v1004
    %1482 = vmatpush.bf16.msra.mxu0 %v1000
    %1483 = vmatpush.bf16.msra.mxu0 %v996
    %1484 = vmatpush.bf16.msra.mxu0 %v992
    %1485 = vmatpush.bf16.msra.mxu0 %v988
    %1486 = vmatpush.bf16.msra.mxu0 %v984
    %1487 = vmatpush.bf16.msra.mxu0 %v980
    %1488 = vmatmul.bf16.gmra.mxu0 %v132
    %v1489 = vpop.f32.mrf.mxu0
    %v1490 = vadd.f32 %v1477, %v1489
    %v1491 = vpop.f32.mrf.mxu0
    %1492 = vdwg.mxu0
    %1493 = vmatpush.bf16.msra.mxu0 %v1040
    %1494 = vmatpush.bf16.msra.mxu0 %v1036
    %1495 = vmatpush.bf16.msra.mxu0 %v1032
    %1496 = vmatpush.bf16.msra.mxu0 %v1028
    %1497 = vmatpush.bf16.msra.mxu0 %v1024
    %1498 = vmatpush.bf16.msra.mxu0 %v1020
    %1499 = vmatpush.bf16.msra.mxu0 %v1016
    %1500 = vmatpush.bf16.msra.mxu0 %v1012
    %1501 = vmatmul.bf16.gmra.mxu0 %v133
    %v1502 = vpop.f32.mrf.mxu0
    %v1503 = vadd.f32 %v1490, %v1502
    %v1504 = vpop.f32.mrf.mxu0
    %1505 = vdwg.mxu0
    %1506 = vmatpush.bf16.msra.mxu0 %v1072
    %1507 = vmatpush.bf16.msra.mxu0 %v1068
    %1508 = vmatpush.bf16.msra.mxu0 %v1064
    %1509 = vmatpush.bf16.msra.mxu0 %v1060
    %1510 = vmatpush.bf16.msra.mxu0 %v1056
    %1511 = vmatpush.bf16.msra.mxu0 %v1052
    %1512 = vmatpush.bf16.msra.mxu0 %v1048
    %1513 = vmatpush.bf16.msra.mxu0 %v1044
    %1514 = vmatmul.bf16.gmra.mxu0 %v134
    %v1515 = vpop.f32.mrf.mxu0
    %v1516 = vadd.f32 %v1503, %v1515
    %v1517 = vpop.f32.mrf.mxu0
    %1518 = vdwg.mxu0
    %1519 = vmatpush.bf16.msra.mxu0 %v1104
    %1520 = vmatpush.bf16.msra.mxu0 %v1100
    %1521 = vmatpush.bf16.msra.mxu0 %v1096
    %1522 = vmatpush.bf16.msra.mxu0 %v1092
    %1523 = vmatpush.bf16.msra.mxu0 %v1088
    %1524 = vmatpush.bf16.msra.mxu0 %v1084
    %1525 = vmatpush.bf16.msra.mxu0 %v1080
    %1526 = vmatpush.bf16.msra.mxu0 %v1076
    %1527 = vmatmul.bf16.gmra.mxu0 %v135
    %v1528 = vpop.f32.mrf.mxu0
    %v1529 = vadd.f32 %v1516, %v1528
    %v1530 = vpop.f32.mrf.mxu0
    %1531 = vdwg.mxu0
    %1532 = vmatpush.bf16.msra.mxu0 %v945
    %1533 = vmatpush.bf16.msra.mxu0 %v941
    %1534 = vmatpush.bf16.msra.mxu0 %v937
    %1535 = vmatpush.bf16.msra.mxu0 %v933
    %1536 = vmatpush.bf16.msra.mxu0 %v929
    %1537 = vmatpush.bf16.msra.mxu0 %v925
    %1538 = vmatpush.bf16.msra.mxu0 %v921
    %1539 = vmatpush.bf16.msra.mxu0 %v917
    %1540 = vmatmul.bf16.gmra.mxu0 %v130
    %v1541 = vpop.f32.mrf.mxu0
    %v1542 = vadd.f32 %v333, %v1541
    %v1543 = vpop.f32.mrf.mxu0
    %1544 = vdwg.mxu0
    %1545 = vmatpush.bf16.msra.mxu0 %v977
    %1546 = vmatpush.bf16.msra.mxu0 %v973
    %1547 = vmatpush.bf16.msra.mxu0 %v969
    %1548 = vmatpush.bf16.msra.mxu0 %v965
    %1549 = vmatpush.bf16.msra.mxu0 %v961
    %1550 = vmatpush.bf16.msra.mxu0 %v957
    %1551 = vmatpush.bf16.msra.mxu0 %v953
    %1552 = vmatpush.bf16.msra.mxu0 %v949
    %1553 = vmatmul.bf16.gmra.mxu0 %v131
    %v1554 = vpop.f32.mrf.mxu0
    %v1555 = vadd.f32 %v1542, %v1554
    %v1556 = vpop.f32.mrf.mxu0
    %1557 = vdwg.mxu0
    %1558 = vmatpush.bf16.msra.mxu0 %v1009
    %1559 = vmatpush.bf16.msra.mxu0 %v1005
    %1560 = vmatpush.bf16.msra.mxu0 %v1001
    %1561 = vmatpush.bf16.msra.mxu0 %v997
    %1562 = vmatpush.bf16.msra.mxu0 %v993
    %1563 = vmatpush.bf16.msra.mxu0 %v989
    %1564 = vmatpush.bf16.msra.mxu0 %v985
    %1565 = vmatpush.bf16.msra.mxu0 %v981
    %1566 = vmatmul.bf16.gmra.mxu0 %v132
    %v1567 = vpop.f32.mrf.mxu0
    %v1568 = vadd.f32 %v1555, %v1567
    %v1569 = vpop.f32.mrf.mxu0
    %1570 = vdwg.mxu0
    %1571 = vmatpush.bf16.msra.mxu0 %v1041
    %1572 = vmatpush.bf16.msra.mxu0 %v1037
    %1573 = vmatpush.bf16.msra.mxu0 %v1033
    %1574 = vmatpush.bf16.msra.mxu0 %v1029
    %1575 = vmatpush.bf16.msra.mxu0 %v1025
    %1576 = vmatpush.bf16.msra.mxu0 %v1021
    %1577 = vmatpush.bf16.msra.mxu0 %v1017
    %1578 = vmatpush.bf16.msra.mxu0 %v1013
    %1579 = vmatmul.bf16.gmra.mxu0 %v133
    %v1580 = vpop.f32.mrf.mxu0
    %v1581 = vadd.f32 %v1568, %v1580
    %v1582 = vpop.f32.mrf.mxu0
    %1583 = vdwg.mxu0
    %1584 = vmatpush.bf16.msra.mxu0 %v1073
    %1585 = vmatpush.bf16.msra.mxu0 %v1069
    %1586 = vmatpush.bf16.msra.mxu0 %v1065
    %1587 = vmatpush.bf16.msra.mxu0 %v1061
    %1588 = vmatpush.bf16.msra.mxu0 %v1057
    %1589 = vmatpush.bf16.msra.mxu0 %v1053
    %1590 = vmatpush.bf16.msra.mxu0 %v1049
    %1591 = vmatpush.bf16.msra.mxu0 %v1045
    %1592 = vmatmul.bf16.gmra.mxu0 %v134
    %v1593 = vpop.f32.mrf.mxu0
    %v1594 = vadd.f32 %v1581, %v1593
    %v1595 = vpop.f32.mrf.mxu0
    %1596 = vdwg.mxu0
    %1597 = vmatpush.bf16.msra.mxu0 %v1105
    %1598 = vmatpush.bf16.msra.mxu0 %v1101
    %1599 = vmatpush.bf16.msra.mxu0 %v1097
    %1600 = vmatpush.bf16.msra.mxu0 %v1093
    %1601 = vmatpush.bf16.msra.mxu0 %v1089
    %1602 = vmatpush.bf16.msra.mxu0 %v1085
    %1603 = vmatpush.bf16.msra.mxu0 %v1081
    %1604 = vmatpush.bf16.msra.mxu0 %v1077
    %1605 = vmatmul.bf16.gmra.mxu0 %v135
    %v1606 = vpop.f32.mrf.mxu0
    %v1607 = vadd.f32 %v1594, %v1606
    %v1608 = vpop.f32.mrf.mxu0
    %1609 = vdwg.mxu0
    %v1610 = vmax.f32 %v1373, 0.0
    %v1611 = vmax.f32 %v1451, 0.0
    %v1612 = vmax.f32 %v1529, 0.0
    %v1613 = vmax.f32 %v1607, 0.0
    %v1614 = vpack.c.bf16 %v1610, %v1610
    %v1615 = vpack.c.bf16 %v1611, %v1611
    %v1616 = vpack.c.bf16 %v1612, %v1612
    %v1617 = vpack.c.bf16 %v1613, %v1613
    %v1618 = vld [vmem:[#allocation5] sm:$0xff]
    %v1619 = vld [vmem:[#allocation5 + $0x8] sm:$0xff]
    %v1620 = vld [vmem:[#allocation5 + $0x10] sm:$0xff]
    %v1621 = vld [vmem:[#allocation5 + $0x18] sm:$0xff]
    %v1622 = vld [vmem:[#allocation5 + $0x20] sm:$0xff]
    %v1623 = vld [vmem:[#allocation5 + $0x28] sm:$0xff]
    %v1624 = vld [vmem:[#allocation5 + $0x30] sm:$0xff]
    %v1625 = vld [vmem:[#allocation5 + $0x38] sm:$0xff]
    %v1626 = vld [vmem:[#allocation5 + $0x40] sm:$0xff]
    %v1627 = vld [vmem:[#allocation5 + $0x48] sm:$0xff]
    %v1628 = vld [vmem:[#allocation5 + $0x50] sm:$0xff]
    %v1629 = vld [vmem:[#allocation5 + $0x58] sm:$0xff]
    %v1630 = vld [vmem:[#allocation5 + $0x60] sm:$0xff]
    %v1631 = vld [vmem:[#allocation5 + $0x68] sm:$0xff]
    %v1632 = vld [vmem:[#allocation5 + $0x70] sm:$0xff]
    %v1633 = vld [vmem:[#allocation5 + $0x78] sm:$0xff]
    %v1634 = vld [vmem:[#allocation5 + $0x80] sm:$0xff]
    %v1635 = vld [vmem:[#allocation5 + $0x88] sm:$0xff]
    %v1636 = vld [vmem:[#allocation5 + $0x90] sm:$0xff]
    %v1637 = vld [vmem:[#allocation5 + $0x98] sm:$0xff]
    %v1638 = vld [vmem:[#allocation5 + $0xa0] sm:$0xff]
    %v1639 = vld [vmem:[#allocation5 + $0xa8] sm:$0xff]
    %v1640 = vld [vmem:[#allocation5 + $0xb0] sm:$0xff]
    %v1641 = vld [vmem:[#allocation5 + $0xb8] sm:$0xff]
    %v1642 = vld [vmem:[#allocation5 + $0xc0] sm:$0xff]
    %v1643 = vld [vmem:[#allocation5 + $0xc8] sm:$0xff]
    %v1644 = vld [vmem:[#allocation5 + $0xd0] sm:$0xff]
    %v1645 = vld [vmem:[#allocation5 + $0xd8] sm:$0xff]
    %v1646 = vld [vmem:[#allocation5 + $0xe0] sm:$0xff]
    %v1647 = vld [vmem:[#allocation5 + $0xe8] sm:$0xff]
    %v1648 = vld [vmem:[#allocation5 + $0xf0] sm:$0xff]
    %v1649 = vld [vmem:[#allocation5 + $0xf8] sm:$0xff]
    %v1650 = vld [vmem:[#allocation5 + $0x100] sm:$0xff]
    %v1651 = vld [vmem:[#allocation5 + $0x108] sm:$0xff]
    %v1652 = vld [vmem:[#allocation5 + $0x110] sm:$0xff]
    %v1653 = vld [vmem:[#allocation5 + $0x118] sm:$0xff]
    %v1654 = vld [vmem:[#allocation5 + $0x120] sm:$0xff]
    %v1655 = vld [vmem:[#allocation5 + $0x128] sm:$0xff]
    %v1656 = vld [vmem:[#allocation5 + $0x130] sm:$0xff]
    %v1657 = vld [vmem:[#allocation5 + $0x138] sm:$0xff]
    %v1658 = vld [vmem:[#allocation5 + $0x140] sm:$0xff]
    %v1659 = vld [vmem:[#allocation5 + $0x148] sm:$0xff]
    %v1660 = vld [vmem:[#allocation5 + $0x150] sm:$0xff]
    %v1661 = vld [vmem:[#allocation5 + $0x158] sm:$0xff]
    %v1662 = vld [vmem:[#allocation5 + $0x160] sm:$0xff]
    %v1663 = vld [vmem:[#allocation5 + $0x168] sm:$0xff]
    %v1664 = vld [vmem:[#allocation5 + $0x170] sm:$0xff]
    %v1665 = vld [vmem:[#allocation5 + $0x178] sm:$0xff]
    %v1666 = vld [vmem:[#allocation5 + $0x180] sm:$0xff]
    %v1667 = vld [vmem:[#allocation5 + $0x188] sm:$0xff]
    %v1668 = vld [vmem:[#allocation5 + $0x190] sm:$0xff]
    %v1669 = vld [vmem:[#allocation5 + $0x198] sm:$0xff]
    %v1670 = vld [vmem:[#allocation5 + $0x1a0] sm:$0xff]
    %v1671 = vld [vmem:[#allocation5 + $0x1a8] sm:$0xff]
    %v1672 = vld [vmem:[#allocation5 + $0x1b0] sm:$0xff]
    %v1673 = vld [vmem:[#allocation5 + $0x1b8] sm:$0xff]
    %v1674 = vld [vmem:[#allocation5 + $0x1c0] sm:$0xff]
    %v1675 = vld [vmem:[#allocation5 + $0x1c8] sm:$0xff]
    %v1676 = vld [vmem:[#allocation5 + $0x1d0] sm:$0xff]
    %v1677 = vld [vmem:[#allocation5 + $0x1d8] sm:$0xff]
    %v1678 = vld [vmem:[#allocation5 + $0x1e0] sm:$0xff]
    %v1679 = vld [vmem:[#allocation5 + $0x1e8] sm:$0xff]
    %v1680 = vld [vmem:[#allocation5 + $0x1f0] sm:$0xff]
    %v1681 = vld [vmem:[#allocation5 + $0x1f8] sm:$0xff]
    %v1682 = vld [vmem:[%s4] sm:$0x3]
    %v1684 = vperm.slane %v1682, 0
    %v1685 = vperm.slane %v1682, 1
    %v1752 = vunpack.c.l.b16 %v1618
    %v1753 = vunpack.c.h.b16 %v1618
    %v1754 = vunpack.c.l.b16 %v1619
    %v1755 = vunpack.c.h.b16 %v1619
    %v1756 = vunpack.c.l.b16 %v1620
    %v1757 = vunpack.c.h.b16 %v1620
    %v1758 = vunpack.c.l.b16 %v1621
    %v1759 = vunpack.c.h.b16 %v1621
    %v1760 = vunpack.c.l.b16 %v1622
    %v1761 = vunpack.c.h.b16 %v1622
    %v1762 = vunpack.c.l.b16 %v1623
    %v1763 = vunpack.c.h.b16 %v1623
    %v1764 = vunpack.c.l.b16 %v1624
    %v1765 = vunpack.c.h.b16 %v1624
    %v1766 = vunpack.c.l.b16 %v1625
    %v1767 = vunpack.c.h.b16 %v1625
    %v1768 = vunpack.c.l.b16 %v1626
    %v1769 = vunpack.c.h.b16 %v1626
    %v1770 = vunpack.c.l.b16 %v1627
    %v1771 = vunpack.c.h.b16 %v1627
    %v1772 = vunpack.c.l.b16 %v1628
    %v1773 = vunpack.c.h.b16 %v1628
    %v1774 = vunpack.c.l.b16 %v1629
    %v1775 = vunpack.c.h.b16 %v1629
    %v1776 = vunpack.c.l.b16 %v1630
    %v1777 = vunpack.c.h.b16 %v1630
    %v1778 = vunpack.c.l.b16 %v1631
    %v1779 = vunpack.c.h.b16 %v1631
    %v1780 = vunpack.c.l.b16 %v1632
    %v1781 = vunpack.c.h.b16 %v1632
    %v1782 = vunpack.c.l.b16 %v1633
    %v1783 = vunpack.c.h.b16 %v1633
    %v1784 = vunpack.c.l.b16 %v1634
    %v1785 = vunpack.c.h.b16 %v1634
    %v1786 = vunpack.c.l.b16 %v1635
    %v1787 = vunpack.c.h.b16 %v1635
    %v1788 = vunpack.c.l.b16 %v1636
    %v1789 = vunpack.c.h.b16 %v1636
    %v1790 = vunpack.c.l.b16 %v1637
    %v1791 = vunpack.c.h.b16 %v1637
    %v1792 = vunpack.c.l.b16 %v1638
    %v1793 = vunpack.c.h.b16 %v1638
    %v1794 = vunpack.c.l.b16 %v1639
    %v1795 = vunpack.c.h.b16 %v1639
    %v1796 = vunpack.c.l.b16 %v1640
    %v1797 = vunpack.c.h.b16 %v1640
    %v1798 = vunpack.c.l.b16 %v1641
    %v1799 = vunpack.c.h.b16 %v1641
    %v1800 = vunpack.c.l.b16 %v1642
    %v1801 = vunpack.c.h.b16 %v1642
    %v1802 = vunpack.c.l.b16 %v1643
    %v1803 = vunpack.c.h.b16 %v1643
    %v1804 = vunpack.c.l.b16 %v1644
    %v1805 = vunpack.c.h.b16 %v1644
    %v1806 = vunpack.c.l.b16 %v1645
    %v1807 = vunpack.c.h.b16 %v1645
    %v1808 = vunpack.c.l.b16 %v1646
    %v1809 = vunpack.c.h.b16 %v1646
    %v1810 = vunpack.c.l.b16 %v1647
    %v1811 = vunpack.c.h.b16 %v1647
    %v1812 = vunpack.c.l.b16 %v1648
    %v1813 = vunpack.c.h.b16 %v1648
    %v1814 = vunpack.c.l.b16 %v1649
    %v1815 = vunpack.c.h.b16 %v1649
    %v1816 = vunpack.c.l.b16 %v1650
    %v1817 = vunpack.c.h.b16 %v1650
    %v1818 = vunpack.c.l.b16 %v1651
    %v1819 = vunpack.c.h.b16 %v1651
    %v1820 = vunpack.c.l.b16 %v1652
    %v1821 = vunpack.c.h.b16 %v1652
    %v1822 = vunpack.c.l.b16 %v1653
    %v1823 = vunpack.c.h.b16 %v1653
    %v1824 = vunpack.c.l.b16 %v1654
    %v1825 = vunpack.c.h.b16 %v1654
    %v1826 = vunpack.c.l.b16 %v1655
    %v1827 = vunpack.c.h.b16 %v1655
    %v1828 = vunpack.c.l.b16 %v1656
    %v1829 = vunpack.c.h.b16 %v1656
    %v1830 = vunpack.c.l.b16 %v1657
    %v1831 = vunpack.c.h.b16 %v1657
    %v1832 = vunpack.c.l.b16 %v1658
    %v1833 = vunpack.c.h.b16 %v1658
    %v1834 = vunpack.c.l.b16 %v1659
    %v1835 = vunpack.c.h.b16 %v1659
    %v1836 = vunpack.c.l.b16 %v1660
    %v1837 = vunpack.c.h.b16 %v1660
    %v1838 = vunpack.c.l.b16 %v1661
    %v1839 = vunpack.c.h.b16 %v1661
    %v1840 = vunpack.c.l.b16 %v1662
    %v1841 = vunpack.c.h.b16 %v1662
    %v1842 = vunpack.c.l.b16 %v1663
    %v1843 = vunpack.c.h.b16 %v1663
    %v1844 = vunpack.c.l.b16 %v1664
    %v1845 = vunpack.c.h.b16 %v1664
    %v1846 = vunpack.c.l.b16 %v1665
    %v1847 = vunpack.c.h.b16 %v1665
    %v1848 = vunpack.c.l.b16 %v1666
    %v1849 = vunpack.c.h.b16 %v1666
    %v1850 = vunpack.c.l.b16 %v1667
    %v1851 = vunpack.c.h.b16 %v1667
    %v1852 = vunpack.c.l.b16 %v1668
    %v1853 = vunpack.c.h.b16 %v1668
    %v1854 = vunpack.c.l.b16 %v1669
    %v1855 = vunpack.c.h.b16 %v1669
    %v1856 = vunpack.c.l.b16 %v1670
    %v1857 = vunpack.c.h.b16 %v1670
    %v1858 = vunpack.c.l.b16 %v1671
    %v1859 = vunpack.c.h.b16 %v1671
    %v1860 = vunpack.c.l.b16 %v1672
    %v1861 = vunpack.c.h.b16 %v1672
    %v1862 = vunpack.c.l.b16 %v1673
    %v1863 = vunpack.c.h.b16 %v1673
    %v1864 = vunpack.c.l.b16 %v1674
    %v1865 = vunpack.c.h.b16 %v1674
    %v1866 = vunpack.c.l.b16 %v1675
    %v1867 = vunpack.c.h.b16 %v1675
    %v1868 = vunpack.c.l.b16 %v1676
    %v1869 = vunpack.c.h.b16 %v1676
    %v1870 = vunpack.c.l.b16 %v1677
    %v1871 = vunpack.c.h.b16 %v1677
    %v1872 = vunpack.c.l.b16 %v1678
    %v1873 = vunpack.c.h.b16 %v1678
    %v1874 = vunpack.c.l.b16 %v1679
    %v1875 = vunpack.c.h.b16 %v1679
    %v1876 = vunpack.c.l.b16 %v1680
    %v1877 = vunpack.c.h.b16 %v1680
    %v1878 = vunpack.c.l.b16 %v1681
    %v1879 = vunpack.c.h.b16 %v1681
    %v1880 = vpack.c.b16 %v1754, %v1752
    %v1881 = vpack.c.b16 %v1755, %v1753
    %v1882 = vpack.c.b16 %v1758, %v1756
    %v1883 = vpack.c.b16 %v1759, %v1757
    %v1884 = vpack.c.b16 %v1762, %v1760
    %v1885 = vpack.c.b16 %v1763, %v1761
    %v1886 = vpack.c.b16 %v1766, %v1764
    %v1887 = vpack.c.b16 %v1767, %v1765
    %v1888 = vpack.c.b16 %v1770, %v1768
    %v1889 = vpack.c.b16 %v1771, %v1769
    %v1890 = vpack.c.b16 %v1774, %v1772
    %v1891 = vpack.c.b16 %v1775, %v1773
    %v1892 = vpack.c.b16 %v1778, %v1776
    %v1893 = vpack.c.b16 %v1779, %v1777
    %v1894 = vpack.c.b16 %v1782, %v1780
    %v1895 = vpack.c.b16 %v1783, %v1781
    %v1896 = vpack.c.b16 %v1786, %v1784
    %v1897 = vpack.c.b16 %v1787, %v1785
    %v1898 = vpack.c.b16 %v1790, %v1788
    %v1899 = vpack.c.b16 %v1791, %v1789
    %v1900 = vpack.c.b16 %v1794, %v1792
    %v1901 = vpack.c.b16 %v1795, %v1793
    %v1902 = vpack.c.b16 %v1798, %v1796
    %v1903 = vpack.c.b16 %v1799, %v1797
    %v1904 = vpack.c.b16 %v1802, %v1800
    %v1905 = vpack.c.b16 %v1803, %v1801
    %v1906 = vpack.c.b16 %v1806, %v1804
    %v1907 = vpack.c.b16 %v1807, %v1805
    %v1908 = vpack.c.b16 %v1810, %v1808
    %v1909 = vpack.c.b16 %v1811, %v1809
    %v1910 = vpack.c.b16 %v1814, %v1812
    %v1911 = vpack.c.b16 %v1815, %v1813
    %v1912 = vpack.c.b16 %v1818, %v1816
    %v1913 = vpack.c.b16 %v1819, %v1817
    %v1914 = vpack.c.b16 %v1822, %v1820
    %v1915 = vpack.c.b16 %v1823, %v1821
    %v1916 = vpack.c.b16 %v1826, %v1824
    %v1917 = vpack.c.b16 %v1827, %v1825
    %v1918 = vpack.c.b16 %v1830, %v1828
    %v1919 = vpack.c.b16 %v1831, %v1829
    %v1920 = vpack.c.b16 %v1834, %v1832
    %v1921 = vpack.c.b16 %v1835, %v1833
    %v1922 = vpack.c.b16 %v1838, %v1836
    %v1923 = vpack.c.b16 %v1839, %v1837
    %v1924 = vpack.c.b16 %v1842, %v1840
    %v1925 = vpack.c.b16 %v1843, %v1841
    %v1926 = vpack.c.b16 %v1846, %v1844
    %v1927 = vpack.c.b16 %v1847, %v1845
    %v1928 = vpack.c.b16 %v1850, %v1848
    %v1929 = vpack.c.b16 %v1851, %v1849
    %v1930 = vpack.c.b16 %v1854, %v1852
    %v1931 = vpack.c.b16 %v1855, %v1853
    %v1932 = vpack.c.b16 %v1858, %v1856
    %v1933 = vpack.c.b16 %v1859, %v1857
    %v1934 = vpack.c.b16 %v1862, %v1860
    %v1935 = vpack.c.b16 %v1863, %v1861
    %v1936 = vpack.c.b16 %v1866, %v1864
    %v1937 = vpack.c.b16 %v1867, %v1865
    %v1938 = vpack.c.b16 %v1870, %v1868
    %v1939 = vpack.c.b16 %v1871, %v1869
    %v1940 = vpack.c.b16 %v1874, %v1872
    %v1941 = vpack.c.b16 %v1875, %v1873
    %v1942 = vpack.c.b16 %v1878, %v1876
    %v1943 = vpack.c.b16 %v1879, %v1877
    %2008 = vmatpush.bf16.msra.mxu0 %v1894
    %2009 = vmatpush.bf16.msra.mxu0 %v1892
    %2010 = vmatpush.bf16.msra.mxu0 %v1890
    %2011 = vmatpush.bf16.msra.mxu0 %v1888
    %2012 = vmatpush.bf16.msra.mxu0 %v1886
    %2013 = vmatpush.bf16.msra.mxu0 %v1884
    %2014 = vmatpush.bf16.msra.mxu0 %v1882
    %2015 = vmatpush.bf16.msra.mxu0 %v1880
    %2016 = vmatmul.bf16.gmra.mxu0 %v1614
    %v2017 = vpop.f32.mrf.mxu0
    %v2018 = vadd.f32 %v1684, %v2017
    %v2019 = vpop.f32.mrf.mxu0
    %2020 = vdwg.mxu0
    %2021 = vmatpush.bf16.msra.mxu0 %v1910
    %2022 = vmatpush.bf16.msra.mxu0 %v1908
    %2023 = vmatpush.bf16.msra.mxu0 %v1906
    %2024 = vmatpush.bf16.msra.mxu0 %v1904
    %2025 = vmatpush.bf16.msra.mxu0 %v1902
    %2026 = vmatpush.bf16.msra.mxu0 %v1900
    %2027 = vmatpush.bf16.msra.mxu0 %v1898
    %2028 = vmatpush.bf16.msra.mxu0 %v1896
    %2029 = vmatmul.bf16.gmra.mxu0 %v1615
    %v2030 = vpop.f32.mrf.mxu0
    %v2031 = vadd.f32 %v2018, %v2030
    %v2032 = vpop.f32.mrf.mxu0
    %2033 = vdwg.mxu0
    %2034 = vmatpush.bf16.msra.mxu0 %v1926
    %2035 = vmatpush.bf16.msra.mxu0 %v1924
    %2036 = vmatpush.bf16.msra.mxu0 %v1922
    %2037 = vmatpush.bf16.msra.mxu0 %v1920
    %2038 = vmatpush.bf16.msra.mxu0 %v1918
    %2039 = vmatpush.bf16.msra.mxu0 %v1916
    %2040 = vmatpush.bf16.msra.mxu0 %v1914
    %2041 = vmatpush.bf16.msra.mxu0 %v1912
    %2042 = vmatmul.bf16.gmra.mxu0 %v1616
    %v2043 = vpop.f32.mrf.mxu0
    %v2044 = vadd.f32 %v2031, %v2043
    %v2045 = vpop.f32.mrf.mxu0
    %2046 = vdwg.mxu0
    %2047 = vmatpush.bf16.msra.mxu0 %v1942
    %2048 = vmatpush.bf16.msra.mxu0 %v1940
    %2049 = vmatpush.bf16.msra.mxu0 %v1938
    %2050 = vmatpush.bf16.msra.mxu0 %v1936
    %2051 = vmatpush.bf16.msra.mxu0 %v1934
    %2052 = vmatpush.bf16.msra.mxu0 %v1932
    %2053 = vmatpush.bf16.msra.mxu0 %v1930
    %2054 = vmatpush.bf16.msra.mxu0 %v1928
    %2055 = vmatmul.bf16.gmra.mxu0 %v1617
    %v2056 = vpop.f32.mrf.mxu0
    %v2057 = vadd.f32 %v2044, %v2056
    %v2058 = vpop.f32.mrf.mxu0
    %2059 = vdwg.mxu0
    %2060 = vmatpush.bf16.msra.mxu0 %v1895
    %2061 = vmatpush.bf16.msra.mxu0 %v1893
    %2062 = vmatpush.bf16.msra.mxu0 %v1891
    %2063 = vmatpush.bf16.msra.mxu0 %v1889
    %2064 = vmatpush.bf16.msra.mxu0 %v1887
    %2065 = vmatpush.bf16.msra.mxu0 %v1885
    %2066 = vmatpush.bf16.msra.mxu0 %v1883
    %2067 = vmatpush.bf16.msra.mxu0 %v1881
    %2068 = vmatmul.bf16.gmra.mxu0 %v1614
    %v2069 = vpop.f32.mrf.mxu0
    %v2070 = vadd.f32 %v1685, %v2069
    %v2071 = vpop.f32.mrf.mxu0
    %2072 = vdwg.mxu0
    %2073 = vmatpush.bf16.msra.mxu0 %v1911
    %2074 = vmatpush.bf16.msra.mxu0 %v1909
    %2075 = vmatpush.bf16.msra.mxu0 %v1907
    %2076 = vmatpush.bf16.msra.mxu0 %v1905
    %2077 = vmatpush.bf16.msra.mxu0 %v1903
    %2078 = vmatpush.bf16.msra.mxu0 %v1901
    %2079 = vmatpush.bf16.msra.mxu0 %v1899
    %2080 = vmatpush.bf16.msra.mxu0 %v1897
    %2081 = vmatmul.bf16.gmra.mxu0 %v1615
    %v2082 = vpop.f32.mrf.mxu0
    %v2083 = vadd.f32 %v2070, %v2082
    %v2084 = vpop.f32.mrf.mxu0
    %2085 = vdwg.mxu0
    %2086 = vmatpush.bf16.msra.mxu0 %v1927
    %2087 = vmatpush.bf16.msra.mxu0 %v1925
    %2088 = vmatpush.bf16.msra.mxu0 %v1923
    %2089 = vmatpush.bf16.msra.mxu0 %v1921
    %2090 = vmatpush.bf16.msra.mxu0 %v1919
    %2091 = vmatpush.bf16.msra.mxu0 %v1917
    %2092 = vmatpush.bf16.msra.mxu0 %v1915
    %2093 = vmatpush.bf16.msra.mxu0 %v1913
    %2094 = vmatmul.bf16.gmra.mxu0 %v1616
    %v2095 = vpop.f32.mrf.mxu0
    %v2096 = vadd.f32 %v2083, %v2095
    %v2097 = vpop.f32.mrf.mxu0
    %2098 = vdwg.mxu0
    %2099 = vmatpush.bf16.msra.mxu0 %v1943
    %2100 = vmatpush.bf16.msra.mxu0 %v1941
    %2101 = vmatpush.bf16.msra.mxu0 %v1939
    %2102 = vmatpush.bf16.msra.mxu0 %v1937
    %2103 = vmatpush.bf16.msra.mxu0 %v1935
    %2104 = vmatpush.bf16.msra.mxu0 %v1933
    %2105 = vmatpush.bf16.msra.mxu0 %v1931
    %2106 = vmatpush.bf16.msra.mxu0 %v1929
    %2107 = vmatmul.bf16.gmra.mxu0 %v1617
    %v2108 = vpop.f32.mrf.mxu0
    %v2109 = vadd.f32 %v2096, %v2108
    %v2110 = vpop.f32.mrf.mxu0
    %2111 = vdwg.mxu0
    %v2112 = vmax.f32 %v2057, 0.0
    %v2113 = vmax.f32 %v2109, 0.0
    %v2114 = vpack.c.bf16 %v2112, %v2112
    %v2115 = vpack.c.bf16 %v2113, %v2113
    %v2116 = vld [vmem:[#allocation7] sm:$0xf]
    %v2117 = vld [vmem:[#allocation7 + $0x4] sm:$0xf]
    %v2118 = vld [vmem:[#allocation7 + $0x8] sm:$0xf]
    %v2119 = vld [vmem:[#allocation7 + $0xc] sm:$0xf]
    %v2120 = vld [vmem:[#allocation7 + $0x10] sm:$0xf]
    %v2121 = vld [vmem:[#allocation7 + $0x14] sm:$0xf]
    %v2122 = vld [vmem:[#allocation7 + $0x18] sm:$0xf]
    %v2123 = vld [vmem:[#allocation7 + $0x1c] sm:$0xf]
    %v2124 = vld [vmem:[#allocation7 + $0x20] sm:$0xf]
    %v2125 = vld [vmem:[#allocation7 + $0x24] sm:$0xf]
    %v2126 = vld [vmem:[#allocation7 + $0x28] sm:$0xf]
    %v2127 = vld [vmem:[#allocation7 + $0x2c] sm:$0xf]
    %v2128 = vld [vmem:[#allocation7 + $0x30] sm:$0xf]
    %v2129 = vld [vmem:[#allocation7 + $0x34] sm:$0xf]
    %v2130 = vld [vmem:[#allocation7 + $0x38] sm:$0xf]
    %v2131 = vld [vmem:[#allocation7 + $0x3c] sm:$0xf]
    %v2132 = vld [vmem:[#allocation7 + $0x40] sm:$0xf]
    %v2133 = vld [vmem:[#allocation7 + $0x44] sm:$0xf]
    %v2134 = vld [vmem:[#allocation7 + $0x48] sm:$0xf]
    %v2135 = vld [vmem:[#allocation7 + $0x4c] sm:$0xf]
    %v2136 = vld [vmem:[#allocation7 + $0x50] sm:$0xf]
    %v2137 = vld [vmem:[#allocation7 + $0x54] sm:$0xf]
    %v2138 = vld [vmem:[#allocation7 + $0x58] sm:$0xf]
    %v2139 = vld [vmem:[#allocation7 + $0x5c] sm:$0xf]
    %v2140 = vld [vmem:[#allocation7 + $0x60] sm:$0xf]
    %v2141 = vld [vmem:[#allocation7 + $0x64] sm:$0xf]
    %v2142 = vld [vmem:[#allocation7 + $0x68] sm:$0xf]
    %v2143 = vld [vmem:[#allocation7 + $0x6c] sm:$0xf]
    %v2144 = vld [vmem:[#allocation7 + $0x70] sm:$0xf]
    %v2145 = vld [vmem:[#allocation7 + $0x74] sm:$0xf]
    %v2146 = vld [vmem:[#allocation7 + $0x78] sm:$0xf]
    %v2147 = vld [vmem:[#allocation7 + $0x7c] sm:$0xf]
    %v2148 = vld [vmem:[%s6] sm:$0x1]
    %v2150 = vperm.slane %v2148, 0
    %v2184 = vunpack.c.l.b16 %v2116
    %v2185 = vunpack.c.l.b16 %v2117
    %v2186 = vunpack.c.l.b16 %v2118
    %v2187 = vunpack.c.l.b16 %v2119
    %v2188 = vunpack.c.l.b16 %v2120
    %v2189 = vunpack.c.l.b16 %v2121
    %v2190 = vunpack.c.l.b16 %v2122
    %v2191 = vunpack.c.l.b16 %v2123
    %v2192 = vunpack.c.l.b16 %v2124
    %v2193 = vunpack.c.l.b16 %v2125
    %v2194 = vunpack.c.l.b16 %v2126
    %v2195 = vunpack.c.l.b16 %v2127
    %v2196 = vunpack.c.l.b16 %v2128
    %v2197 = vunpack.c.l.b16 %v2129
    %v2198 = vunpack.c.l.b16 %v2130
    %v2199 = vunpack.c.l.b16 %v2131
    %v2200 = vunpack.c.l.b16 %v2132
    %v2201 = vunpack.c.l.b16 %v2133
    %v2202 = vunpack.c.l.b16 %v2134
    %v2203 = vunpack.c.l.b16 %v2135
    %v2204 = vunpack.c.l.b16 %v2136
    %v2205 = vunpack.c.l.b16 %v2137
    %v2206 = vunpack.c.l.b16 %v2138
    %v2207 = vunpack.c.l.b16 %v2139
    %v2208 = vunpack.c.l.b16 %v2140
    %v2209 = vunpack.c.l.b16 %v2141
    %v2210 = vunpack.c.l.b16 %v2142
    %v2211 = vunpack.c.l.b16 %v2143
    %v2212 = vunpack.c.l.b16 %v2144
    %v2213 = vunpack.c.l.b16 %v2145
    %v2214 = vunpack.c.l.b16 %v2146
    %v2215 = vunpack.c.l.b16 %v2147
    %v2216 = vpack.c.b16 %v2185, %v2184
    %v2217 = vpack.c.b16 %v2187, %v2186
    %v2218 = vpack.c.b16 %v2189, %v2188
    %v2219 = vpack.c.b16 %v2191, %v2190
    %v2220 = vpack.c.b16 %v2193, %v2192
    %v2221 = vpack.c.b16 %v2195, %v2194
    %v2222 = vpack.c.b16 %v2197, %v2196
    %v2223 = vpack.c.b16 %v2199, %v2198
    %v2224 = vpack.c.b16 %v2201, %v2200
    %v2225 = vpack.c.b16 %v2203, %v2202
    %v2226 = vpack.c.b16 %v2205, %v2204
    %v2227 = vpack.c.b16 %v2207, %v2206
    %v2228 = vpack.c.b16 %v2209, %v2208
    %v2229 = vpack.c.b16 %v2211, %v2210
    %v2230 = vpack.c.b16 %v2213, %v2212
    %v2231 = vpack.c.b16 %v2215, %v2214
    %2248 = vmatpush.bf16.msra.mxu0 %v2223
    %2249 = vmatpush.bf16.msra.mxu0 %v2222
    %2250 = vmatpush.bf16.msra.mxu0 %v2221
    %2251 = vmatpush.bf16.msra.mxu0 %v2220
    %2252 = vmatpush.bf16.msra.mxu0 %v2219
    %2253 = vmatpush.bf16.msra.mxu0 %v2218
    %2254 = vmatpush.bf16.msra.mxu0 %v2217
    %2255 = vmatpush.bf16.msra.mxu0 %v2216
    %2256 = vmatmul.bf16.gmra.mxu0 %v2114
    %v2257 = vpop.f32.mrf.mxu0
    %v2258 = vadd.f32 %v2150, %v2257
    %v2259 = vpop.f32.mrf.mxu0
    %2260 = vdwg.mxu0
    %2261 = vmatpush.bf16.msra.mxu0 %v2231
    %2262 = vmatpush.bf16.msra.mxu0 %v2230
    %2263 = vmatpush.bf16.msra.mxu0 %v2229
    %2264 = vmatpush.bf16.msra.mxu0 %v2228
    %2265 = vmatpush.bf16.msra.mxu0 %v2227
    %2266 = vmatpush.bf16.msra.mxu0 %v2226
    %2267 = vmatpush.bf16.msra.mxu0 %v2225
    %2268 = vmatpush.bf16.msra.mxu0 %v2224
    %2269 = vmatmul.bf16.gmra.mxu0 %v2115
    %v2270 = vpop.f32.mrf.mxu0
    %v2271 = vadd.f32 %v2258, %v2270
    %v2272 = vpop.f32.mrf.mxu0
    %2273 = vdwg.mxu0
    %v2274 = vmax.f32 %v2271, 0.0
    %v2275 = vpack.c.bf16 %v2274, %v2274
    %v2276 = vld [vmem:[%s7] sm:$0xf]
    %v2277 = vld [vmem:[%s7 + $0x4] sm:$0xf]
    %v2278 = vld [vmem:[%s7 + $0x8] sm:$0xf]
    %v2279 = vld [vmem:[%s7 + $0xc] sm:$0xf]
    %v2280 = vld [vmem:[%s7 + $0x10] sm:$0xf]
    %v2281 = vld [vmem:[%s7 + $0x14] sm:$0xf]
    %v2282 = vld [vmem:[%s7 + $0x18] sm:$0xf]
    %v2283 = vld [vmem:[%s7 + $0x1c] sm:$0xf]
    %v2284 = vld [vmem:[%s7 + $0x20] sm:$0xf]
    %v2285 = vld [vmem:[%s7 + $0x24] sm:$0xf]
    %v2286 = vld [vmem:[%s7 + $0x28] sm:$0xf]
    %v2287 = vld [vmem:[%s7 + $0x2c] sm:$0xf]
    %v2288 = vld [vmem:[%s7 + $0x30] sm:$0xf]
    %v2289 = vld [vmem:[%s7 + $0x34] sm:$0xf]
    %v2290 = vld [vmem:[%s7 + $0x38] sm:$0xf]
    %v2291 = vld [vmem:[%s7 + $0x3c] sm:$0xf]
    %v2292 = vld [vmem:[%s8] sm:$0x1]
    %v2294 = vperm.slane %v2292, 0
    %v2312 = vunpack.c.l.b16 %v2276
    %v2313 = vunpack.c.l.b16 %v2277
    %v2314 = vunpack.c.l.b16 %v2278
    %v2315 = vunpack.c.l.b16 %v2279
    %v2316 = vunpack.c.l.b16 %v2280
    %v2317 = vunpack.c.l.b16 %v2281
    %v2318 = vunpack.c.l.b16 %v2282
    %v2319 = vunpack.c.l.b16 %v2283
    %v2320 = vunpack.c.l.b16 %v2284
    %v2321 = vunpack.c.l.b16 %v2285
    %v2322 = vunpack.c.l.b16 %v2286
    %v2323 = vunpack.c.l.b16 %v2287
    %v2324 = vunpack.c.l.b16 %v2288
    %v2325 = vunpack.c.l.b16 %v2289
    %v2326 = vunpack.c.l.b16 %v2290
    %v2327 = vunpack.c.l.b16 %v2291
    %v2328 = vpack.c.b16 %v2313, %v2312
    %v2329 = vpack.c.b16 %v2315, %v2314
    %v2330 = vpack.c.b16 %v2317, %v2316
    %v2331 = vpack.c.b16 %v2319, %v2318
    %v2332 = vpack.c.b16 %v2321, %v2320
    %v2333 = vpack.c.b16 %v2323, %v2322
    %v2334 = vpack.c.b16 %v2325, %v2324
    %v2335 = vpack.c.b16 %v2327, %v2326
    %2344 = vmatpush.bf16.msra.mxu0 %v2335
    %2345 = vmatpush.bf16.msra.mxu0 %v2334
    %2346 = vmatpush.bf16.msra.mxu0 %v2333
    %2347 = vmatpush.bf16.msra.mxu0 %v2332
    %2348 = vmatpush.bf16.msra.mxu0 %v2331
    %2349 = vmatpush.bf16.msra.mxu0 %v2330
    %2350 = vmatpush.bf16.msra.mxu0 %v2329
    %2351 = vmatpush.bf16.msra.mxu0 %v2328
    %2352 = vmatmul.bf16.gmra.mxu0 %v2275
    %v2353 = vpop.f32.mrf.mxu0
    %v2354 = vadd.f32 %v2294, %v2353
    %v2355 = vpop.f32.mrf.mxu0
    %2356 = vdwg.mxu0
    %v2357 = vmax.f32 %v2354, 0.0
    %v2358 = vld [vmem:[%s9] sm:$0x1]
    %v2360 = vperm.slane %v2358, 0
    %v2362 = vmul.f32 %v2357, %v2360
    %vm2363 = vcmask 523264
    %v2364 = vsel %vm2363, %v2362, 0.0
    %2365 = vadd.xlane.f32.xlu0 %v2364
    %v2366 = vpop.xlane.xlu0 %2365
    %v2367 = vld [vmem:[#allocation2] sm:$0x1]
    %v2369 = vperm.slane %v2367, 0
    %v2371 = vadd.f32 %v2366, %v2369
    %v2372 = vmax.f32 %v2371, 0.0
    %v2373 = vmax.f32 %v2372, 0.0
    %v2374 = vmin.f32 %v2373, 10.0
    %vm2375 = vcmask 7168
    %2376 = vst.msk [vmem:[#allocation8] sm:$0xff] %vm2375, %v2374
    // Predicated region
    $region58: #{syntactic_complexity_forward.1} parent=1 // pred_check
      _
    $region59: #{syntactic_complexity_forward.1} parent=1 // pred_check_branch
      %2378 = sbr.rel (0) target = $region61
    $region60: #{syntactic_complexity_forward.1} parent=1 // pred_region
      // Predicated region
      $region62: #{syntactic_complexity_forward.1} parent=60 // pred_check
        _
      $region63: #{syntactic_complexity_forward.1} parent=60 // pred_check_branch
        %2380 = sbr.rel (0) target = $region65
      $region64: #{syntactic_complexity_forward.1} parent=60 // pred_region
        // Predicated region
        $region66: #{syntactic_complexity_forward.1} parent=64 // pred_check
          _
        $region67: #{syntactic_complexity_forward.1} parent=64 // pred_check_branch
          %2382 = sbr.rel target = $region69
        $region68: #{syntactic_complexity_forward.1} parent=64 // pred_region
          // Predicated region
          $region81: #{syntactic_complexity_forward.1} parent=68 // pred_check
            _
          $region82: #{syntactic_complexity_forward.1} parent=68 // pred_check_branch
            %2398 = sbr.rel (0) target = $region84
          $region83: #{syntactic_complexity_forward.1} parent=68 // pred_region
            %s2400 = ssub.s32 4, 1
            loop: start=0, step=1, limit=1
            $region85: #{syntactic_complexity_forward.1} parent=83 // loop_pre_header
              _
            $region86: #{syntactic_complexity_forward.1} parent=83 // loop_header
              %s2402 = sphi 0, %s2406
              %p2403 = scmp.ge.s32.totalorder %s2402, 1
              %s2407 = sphi [#allocation8], [#allocation8]
              %s2408 = sphi %s11, %s11
            $region87: #{syntactic_complexity_forward.1} parent=83 // loop_header_branch
              %2405 = sbr.rel (%p2403) target = $region91
            $region88: #{syntactic_complexity_forward.1} parent=83 // loop_body
              %v2409 = vld [vmem:[%s2407] sm:%s2400]
              %2410 = vst [vmem:[%s2408] sm:%s2400] %v2409
            $region89: #{syntactic_complexity_forward.1} parent=83 // loop_footer
              %s2406 = sadd.s32 1, %s2402
            $region90: #{syntactic_complexity_forward.1} parent=83 // loop_footer_branch
              %2401 = sbr.rel target = $region86
            $region91: #{syntactic_complexity_forward.1} parent=83 // loop_exit
              _
          $region84: #{syntactic_complexity_forward.1} parent=68 // pred_fallthru
            _
        $region69: #{syntactic_complexity_forward.1} parent=64 // pred_fallthru
          _
        // Predicated region
        $region70: #{syntactic_complexity_forward.1} parent=64 // pred_check
          _
        $region71: #{syntactic_complexity_forward.1} parent=64 // pred_check_branch
          %2384 = sbr.rel (0) target = $region73
        $region72: #{syntactic_complexity_forward.1} parent=64 // pred_region
          %s2386 = ssub.s32 4, 1
          loop: start=0, step=1, limit=1
          $region74: #{syntactic_complexity_forward.1} parent=72 // loop_pre_header
            _
          $region75: #{syntactic_complexity_forward.1} parent=72 // loop_header
            %s2388 = sphi 0, %s2392
            %p2389 = scmp.ge.s32.totalorder %s2388, 1
            %s2393 = sphi [#allocation8], [#allocation8]
            %s2394 = sphi %s11, %s11
          $region76: #{syntactic_complexity_forward.1} parent=72 // loop_header_branch
            %2391 = sbr.rel (%p2389) target = $region80
          $region77: #{syntactic_complexity_forward.1} parent=72 // loop_body
            %v2395 = vld [vmem:[%s2393] sm:%s2386]
            %2396 = vst [vmem:[%s2394] sm:%s2386] %v2395
          $region78: #{syntactic_complexity_forward.1} parent=72 // loop_footer
            %s2392 = sadd.s32 1, %s2388
          $region79: #{syntactic_complexity_forward.1} parent=72 // loop_footer_branch
            %2387 = sbr.rel target = $region75
          $region80: #{syntactic_complexity_forward.1} parent=72 // loop_exit
            _
        $region73: #{syntactic_complexity_forward.1} parent=64 // pred_fallthru
          _
      $region65: #{syntactic_complexity_forward.1} parent=60 // pred_fallthru
        _
      %2411 = vnop
    $region61: #{syntactic_complexity_forward.1} parent=1 // pred_fallthru
      _
    // Predicated region
    $region92: #{syntactic_complexity_forward.1} parent=1 // pred_check
      _
    $region93: #{syntactic_complexity_forward.1} parent=1 // pred_check_branch
      %2413 = sbr.rel (0) target = $region95
    $region94: #{syntactic_complexity_forward.1} parent=1 // pred_region
      _
    $region95: #{syntactic_complexity_forward.1} parent=1 // pred_fallthru
      _
    %2414 = vsyncpa [#allocation4], 1
    %2415 = vsyncpa [#allocation6], 1

</llo_original>
